<compile_context>
chip_gen: v7x
topology: tpu7x:2x2x1
jax: 0.10.0
libtpu: 0.0.40
codegen_flags: <defaults>
</compile_context>

<pallas_src>
import functools

import jax
import jax.numpy as jnp
from jax.experimental import pallas as pl
from jax.experimental.pallas import tpu as pltpu


_VMEM_DATA_BUDGET = 32 * 1024 * 1024   # conservative across v5e/v6e/v7x
_VMEM_LIMIT_BYTES = 48 * 1024 * 1024


def _round_up(x, m):
    return ((x + m - 1) // m) * m


# ---------------------------------------------------------------------------
# Kernel bodies
# ---------------------------------------------------------------------------
def _build_kernel(n_branches, k_tiled):
    """Fused Linear -> ReLU -> Linear over `n_branches` shared-weight inputs.

    Ref layout: x_refs (n), W1, b1, W2, b2, o_refs (n), [acc_refs (n) if k_tiled].
    grid = (m_tiles, k_tiles);  x block (tm, tk) bf16, W1 block (tk, H) bf16.
    """

    def kernel(*refs):
        x_refs = refs[:n_branches]
        w1_ref, b1_ref, w2_ref, b2_ref = refs[n_branches:n_branches + 4]
        o_refs = refs[n_branches + 4:2 * n_branches + 4]
        acc_refs = refs[2 * n_branches + 4:]

        def finalize(acc_f32, o_ref):
            h = jnp.maximum(acc_f32 + b1_ref[...], 0.0)          # f32 bias + ReLU
            out = jnp.dot(h.astype(jnp.bfloat16), w2_ref[...],   # bf16 operands,
                          preferred_element_type=jnp.float32)    # f32 accumulate
            o_ref[...] = (out + b2_ref[...]).astype(o_ref.dtype)  # lane-dense store

        if not k_tiled:
            # Single K step: no accumulator round-trip, no pl.when branches.
            for x_ref, o_ref in zip(x_refs, o_refs):
                acc = jnp.dot(x_ref[...], w1_ref[...],
                              preferred_element_type=jnp.float32)
                finalize(acc, o_ref)
            return

        k = pl.program_id(1)

        @pl.when(k == 0)
        def _():
            for acc_ref in acc_refs:
                acc_ref[...] = jnp.zeros_like(acc_ref)

        for x_ref, acc_ref in zip(x_refs, acc_refs):
            acc_ref[...] += jnp.dot(x_ref[...], w1_ref[...],
                                    preferred_element_type=jnp.float32)

        @pl.when(k == pl.num_programs(1) - 1)
        def _():
            for acc_ref, o_ref in zip(acc_refs, o_refs):
                finalize(acc_ref[...], o_ref)

    return kernel


# ---------------------------------------------------------------------------
# Tiling selection
# ---------------------------------------------------------------------------
def _pick_tk(tm, d_pad, hid, e_pad, n_branches):
    """Largest K tile (multiple of 128, dividing d_pad) under the VMEM budget."""
    fixed = 2 * hid * e_pad * 2                    # W2 bf16 (double-buffered)
    fixed += 2 * (hid + e_pad) * 4                 # biases (f32)
    fixed += n_branches * 2 * tm * e_pad * 4       # outputs (f32, double-buffered)

    def fits(tk, with_acc):
        per_k = 2 * tk * hid * 2                   # W1 block (bf16, dbl-buffered)
        per_k += n_branches * 2 * tm * tk * 2      # x blocks (bf16, dbl-buffered)
        acc = n_branches * tm * hid * 4 if with_acc else 0
        return fixed + per_k + acc <= _VMEM_DATA_BUDGET

    if fits(d_pad, with_acc=False):
        return d_pad                               # single K step, no accumulator
    tk = 128
    for cand in range(d_pad - 128, 0, -128):       # exact divisors of d_pad only
        if d_pad % cand == 0 and fits(cand, with_acc=True):
            tk = cand
            break
    return tk


# ---------------------------------------------------------------------------
# pallas_call wrapper
# ---------------------------------------------------------------------------
def _embed_pallas(xs, w1, b1, w2, b2):
    """xs: tuple of (m_pad, d_pad) bf16 arrays (identical shapes).

    Returns a tuple of (m_pad, e_pad) f32 embeddings, one per branch.
    """
    n_br = len(xs)
    m_pad, d_pad = xs[0].shape
    hid = w1.shape[1]
    e_pad = w2.shape[1]

    tm = m_pad if m_pad <= 256 else 256            # caller makes m_pad % tm == 0
    m_tiles = m_pad // tm
    tk = _pick_tk(tm, d_pad, hid, e_pad, n_br)
    k_tiles = d_pad // tk
    k_tiled = k_tiles > 1

    kernel = _build_kernel(n_br, k_tiled)

    x_spec = pl.BlockSpec((tm, tk), lambda i, k: (i, k))
    in_specs = [x_spec] * n_br + [
        pl.BlockSpec((tk, hid), lambda i, k: (k, 0)),    # W1 (streams over K)
        pl.BlockSpec((1, hid), lambda i, k: (0, 0)),     # b1 (resident)
        pl.BlockSpec((hid, e_pad), lambda i, k: (0, 0)),  # W2 (resident)
        pl.BlockSpec((1, e_pad), lambda i, k: (0, 0)),   # b2 (resident)
    ]
    out_specs = tuple(pl.BlockSpec((tm, e_pad), lambda i, k: (i, 0))
                      for _ in range(n_br))
    out_shape = tuple(jax.ShapeDtypeStruct((m_pad, e_pad), jnp.float32)
                      for _ in range(n_br))
    scratch_shapes = ([pltpu.VMEM((tm, hid), jnp.float32) for _ in range(n_br)]
                      if k_tiled else [])

    return pl.pallas_call(
        kernel,
        out_shape=out_shape,
        grid=(m_tiles, k_tiles),
        in_specs=in_specs,
        out_specs=out_specs,
        scratch_shapes=scratch_shapes,
        compiler_params=pltpu.CompilerParams(
            dimension_semantics=("parallel", "arbitrary"),
            vmem_limit_bytes=_VMEM_LIMIT_BYTES),
    )(*xs, w1, b1, w2, b2)


def _prep_input(x, m_pad, d_pad):
    """Flatten, cast to bf16, pad rows to m_pad and features to d_pad."""
    n = x.shape[0]
    xf = x.reshape(n, -1).astype(jnp.bfloat16)
    d = xf.shape[1]
    if n != m_pad or d != d_pad:
        xf = jnp.pad(xf, ((0, m_pad - n), (0, d_pad - d)))
    return xf


def _batch_pad(n):
    m_pad = _round_up(max(n, 16), 16)      # full bf16 vregs (16 sublanes)
    if m_pad > 256:
        m_pad = _round_up(m_pad, 256)      # divisible by the M tile (tm=256)
    return m_pad


@functools.partial(jax.jit, static_argnames=("emb_dim",))
def _siamese_forward_pair(x1, x2, w1, b1, w2, b2, *, emb_dim):
    """Both Siamese branches in ONE pallas_call (weights DMA'd once, no concat)."""
    n1, n2 = x1.shape[0], x2.shape[0]
    d_pad = w1.shape[0]
    m_pad = _batch_pad(max(n1, n2))
    x1p = _prep_input(x1, m_pad, d_pad)
    x2p = _prep_input(x2, m_pad, d_pad)
    o1, o2 = _embed_pallas((x1p, x2p), w1, b1, w2, b2)
    return o1[:n1, :emb_dim], o2[:n2, :emb_dim]


@functools.partial(jax.jit, static_argnames=("emb_dim",))
def _embed_single(x, w1, b1, w2, b2, *, emb_dim):
    n = x.shape[0]
    d_pad = w1.shape[0]
    m_pad = _batch_pad(n)
    xp = _prep_input(x, m_pad, d_pad)
    (o,) = _embed_pallas((xp,), w1, b1, w2, b2)
    return o[:n, :emb_dim]


# ---------------------------------------------------------------------------
# SiameseNet wrapper (mirrors the PyTorch module)
# ---------------------------------------------------------------------------
class SiameseNet:
    """JAX/Pallas port of the PyTorch SiameseNet wrapper.

    forward(x1, x2) -> (embedding_net(x1), embedding_net(x2)) with shared
    weights.  The single-arg (multi_args=False) path runs both branches in one
    fused Pallas call.
    """

    def __init__(self, params, multi_args=True):
        w1, b1, w2, b2 = params
        w1 = jnp.asarray(w1, jnp.float32)
        b1 = jnp.asarray(b1, jnp.float32).reshape(1, -1)
        w2 = jnp.asarray(w2, jnp.float32)
        b2 = jnp.asarray(b2, jnp.float32).reshape(1, -1)

        d, hid = w1.shape
        self.emb_dim = w2.shape[1]
        d_pad = _round_up(d, 128)
        h_pad = _round_up(hid, 128)
        e_pad = _round_up(self.emb_dim, 128)

        # Pre-pack the shared weights ONCE: zero-pad to lane-dense shapes and
        # cast matmul operands to bf16 (native MXU dtype, half the HBM bytes).
        # Zero-padded hidden columns pass through ReLU(0)=0 and multiply zero
        # W2 rows, so the extra lanes contribute nothing.
        self.w1 = jnp.pad(w1, ((0, d_pad - d), (0, h_pad - hid))
                          ).astype(jnp.bfloat16)
        self.b1 = jnp.pad(b1, ((0, 0), (0, h_pad - hid)))
        self.w2 = jnp.pad(w2, ((0, h_pad - hid), (0, e_pad - self.emb_dim))
                          ).astype(jnp.bfloat16)
        self.b2 = jnp.pad(b2, ((0, 0), (0, e_pad - self.emb_dim)))
        self.multi_args = multi_args

    def embedding_net(self, x):
        return _embed_single(x, self.w1, self.b1, self.w2, self.b2,
                             emb_dim=self.emb_dim)

    def forward(self, x1, x2):
        if self.multi_args:
            # TODO(synk): arbitrary multi-arg embedding nets cannot be fused
            # generically; fall back to two shared-weight calls.
            output1 = self.embedding_net(*x1)
            output2 = self.embedding_net(*x2)
            return (output1, output2)
        # Fused path: one kernel over both branches (shared weight stream,
        # no concat / no extra HBM pass over the activations).
        return _siamese_forward_pair(x1, x2, self.w1, self.b1, self.w2,
                                     self.b2, emb_dim=self.emb_dim)

    def get_embedding(self, x):
        return self.embedding_net(x)


# ---------------------------------------------------------------------------
# Deterministic synthetic params + pure-jnp reference
# ---------------------------------------------------------------------------
def init_params(key, d, hidden, emb):
    k1, k2, k3, k4 = jax.random.split(key, 4)
    w1 = jax.random.normal(k1, (d, hidden), jnp.float32) * (1.0 / jnp.sqrt(d))
    b1 = jax.random.normal(k2, (1, hidden), jnp.float32) * 0.01
    w2 = jax.random.normal(k3, (hidden, emb), jnp.float32) * (1.0 / jnp.sqrt(hidden))
    b2 = jax.random.normal(k4, (1, emb), jnp.float32) * 0.01
    return (w1, b1, w2, b2)


def _reference_embedding(x_nchw, params):
    """Pure-jnp reference emulating the kernel's bf16-operand / f32-accum math."""
    w1, b1, w2, b2 = params
    n = x_nchw.shape[0]
    x = x_nchw.reshape(n, -1)
    h = jnp.dot(x.astype(jnp.bfloat16), w1.astype(jnp.bfloat16),
                preferred_element_type=jnp.float32) + b1
    h = jnp.maximum(h, 0.0)
    out = jnp.dot(h.astype(jnp.bfloat16), w2.astype(jnp.bfloat16),
                  preferred_element_type=jnp.float32) + b2
    return out


if __name__ == "__main__":
    key = jax.random.PRNGKey(0)
    kx1, kx2, kp = jax.random.split(key, 3)

    # Small NCHW inputs consistent with an image-embedding net.
    N, C, H, W = 2, 4, 16, 16
    D = C * H * W          # 1024
    HID, EMB = 128, 32

    x1 = jax.random.normal(kx1, (N, C, H, W), jnp.float32)
    x2 = jax.random.normal(kx2, (N, C, H, W), jnp.float32)

    params = init_params(kp, D, HID, EMB)
    net = SiameseNet(params, multi_args=False)

    out1, out2 = net.forward(x1, x2)
    out1 = jax.block_until_ready(out1)
    out2 = jax.block_until_ready(out2)

    ref1 = _reference_embedding(x1, params)
    ref2 = _reference_embedding(x2, params)
    assert out1.shape == (N, EMB) and out2.shape == (N, EMB)
    assert jnp.allclose(out1, ref1, atol=2e-2, rtol=2e-2)
    assert jnp.allclose(out2, ref2, atol=2e-2, rtol=2e-2)

    # Single-branch path (get_embedding) shares the same kernel/weights.
    e1 = jax.block_until_ready(net.get_embedding(x1))
    assert jnp.allclose(e1, ref1, atol=2e-2, rtol=2e-2)

    print("KERNEL_OK")
</pallas_src>

<mosaic_0001>
module attributes {stable_mosaic.version = 11 : i64} {
  func.func @kernel(%arg0: i32, %arg1: i32, %arg2: memref<16x1024xbf16, #tpu.memory_space<vmem>>, %arg3: memref<16x1024xbf16, #tpu.memory_space<vmem>>, %arg4: memref<1024x128xbf16, #tpu.memory_space<vmem>>, %arg5: memref<1x128xf32, #tpu.memory_space<vmem>>, %arg6: memref<128x128xbf16, #tpu.memory_space<vmem>>, %arg7: memref<1x128xf32, #tpu.memory_space<vmem>>, %arg8: memref<16x128xf32, #tpu.memory_space<vmem>>, %arg9: memref<16x128xf32, #tpu.memory_space<vmem>>) attributes {dimension_semantics = [#tpu.dimension_semantics<parallel>, #tpu.dimension_semantics<arbitrary>], iteration_bounds = array<i64: 1, 1>, scalar_prefetch = 0 : i64, scratch_operands = 0 : i64, tpu.core_type = #tpu.core_type<tc>, window_params = [{transform_indices = @transform_0, window_bounds = array<i64: 16, 1024>}, {transform_indices = @transform_1, window_bounds = array<i64: 16, 1024>}, {transform_indices = @transform_2, window_bounds = array<i64: 1024, 128>}, {pipeline_mode = #tpu.pipeline_mode<synchronous>, transform_indices = @transform_3, window_bounds = array<i64: 1, 128>}, {pipeline_mode = #tpu.pipeline_mode<synchronous>, transform_indices = @transform_4, window_bounds = array<i64: 128, 128>}, {pipeline_mode = #tpu.pipeline_mode<synchronous>, transform_indices = @transform_5, window_bounds = array<i64: 1, 128>}, {transform_indices = @transform_6, window_bounds = array<i64: 16, 128>}, {transform_indices = @transform_7, window_bounds = array<i64: 16, 128>}]} {
    %c0 = arith.constant 0 : index
    %c0_0 = arith.constant 0 : index
    %0 = vector.load %arg2[%c0, %c0_0] : memref<16x1024xbf16, #tpu.memory_space<vmem>>, vector<16x1024xbf16>
    %c0_1 = arith.constant 0 : index
    %c0_2 = arith.constant 0 : index
    %1 = vector.load %arg4[%c0_1, %c0_2] : memref<1024x128xbf16, #tpu.memory_space<vmem>>, vector<1024x128xbf16>
    %cst = arith.constant dense<0.000000e+00> : vector<16x128xf32>
    %2 = tpu.matmul %0, %1, %cst {dimension_numbers = #tpu.dot_dimension_numbers<[1], [0], [0], [1], [0, 0, 1, 1], [], []>} : vector<16x1024xbf16>, vector<1024x128xbf16>, vector<16x128xf32> -> vector<16x128xf32>
    %c0_3 = arith.constant 0 : index
    %c0_4 = arith.constant 0 : index
    %3 = vector.load %arg5[%c0_3, %c0_4] : memref<1x128xf32, #tpu.memory_space<vmem>>, vector<1x128xf32>
    %4 = vector.broadcast %3 : vector<1x128xf32> to vector<16x128xf32>
    %5 = arith.addf %2, %4 : vector<16x128xf32>
    %cst_5 = arith.constant 0.000000e+00 : f32
    %6 = vector.broadcast %cst_5 : f32 to vector<16x128xf32>
    %7 = arith.maximumf %5, %6 : vector<16x128xf32>
    %8 = arith.truncf %7 : vector<16x128xf32> to vector<16x128xbf16>
    %c0_6 = arith.constant 0 : index
    %c0_7 = arith.constant 0 : index
    %9 = vector.load %arg6[%c0_6, %c0_7] : memref<128x128xbf16, #tpu.memory_space<vmem>>, vector<128x128xbf16>
    %cst_8 = arith.constant dense<0.000000e+00> : vector<16x128xf32>
    %10 = tpu.matmul %8, %9, %cst_8 {dimension_numbers = #tpu.dot_dimension_numbers<[1], [0], [0], [1], [0, 0, 1, 1], [], []>} : vector<16x128xbf16>, vector<128x128xbf16>, vector<16x128xf32> -> vector<16x128xf32>
    %c0_9 = arith.constant 0 : index
    %c0_10 = arith.constant 0 : index
    %11 = vector.load %arg7[%c0_9, %c0_10] : memref<1x128xf32, #tpu.memory_space<vmem>>, vector<1x128xf32>
    %12 = vector.broadcast %11 : vector<1x128xf32> to vector<16x128xf32>
    %13 = arith.addf %10, %12 : vector<16x128xf32>
    %c0_11 = arith.constant 0 : index
    %c0_12 = arith.constant 0 : index
    %14 = vector.load %arg8[%c0_11, %c0_12] : memref<16x128xf32, #tpu.memory_space<vmem>>, vector<16x128xf32>
    tpu.vector_store %arg8[%c0_11, %c0_12], %13 {strides = array<i32>} : memref<16x128xf32, #tpu.memory_space<vmem>>, vector<16x128xf32>,
    %c0_13 = arith.constant 0 : index
    %c0_14 = arith.constant 0 : index
    %15 = vector.load %arg3[%c0_13, %c0_14] : memref<16x1024xbf16, #tpu.memory_space<vmem>>, vector<16x1024xbf16>
    %c0_15 = arith.constant 0 : index
    %c0_16 = arith.constant 0 : index
    %16 = vector.load %arg4[%c0_15, %c0_16] : memref<1024x128xbf16, #tpu.memory_space<vmem>>, vector<1024x128xbf16>
    %cst_17 = arith.constant dense<0.000000e+00> : vector<16x128xf32>
    %17 = tpu.matmul %15, %16, %cst_17 {dimension_numbers = #tpu.dot_dimension_numbers<[1], [0], [0], [1], [0, 0, 1, 1], [], []>} : vector<16x1024xbf16>, vector<1024x128xbf16>, vector<16x128xf32> -> vector<16x128xf32>
    %c0_18 = arith.constant 0 : index
    %c0_19 = arith.constant 0 : index
    %18 = vector.load %arg5[%c0_18, %c0_19] : memref<1x128xf32, #tpu.memory_space<vmem>>, vector<1x128xf32>
    %19 = vector.broadcast %18 : vector<1x128xf32> to vector<16x128xf32>
    %20 = arith.addf %17, %19 : vector<16x128xf32>
    %cst_20 = arith.constant 0.000000e+00 : f32
    %21 = vector.broadcast %cst_20 : f32 to vector<16x128xf32>
    %22 = arith.maximumf %20, %21 : vector<16x128xf32>
    %23 = arith.truncf %22 : vector<16x128xf32> to vector<16x128xbf16>
    %c0_21 = arith.constant 0 : index
    %c0_22 = arith.constant 0 : index
    %24 = vector.load %arg6[%c0_21, %c0_22] : memref<128x128xbf16, #tpu.memory_space<vmem>>, vector<128x128xbf16>
    %cst_23 = arith.constant dense<0.000000e+00> : vector<16x128xf32>
    %25 = tpu.matmul %23, %24, %cst_23 {dimension_numbers = #tpu.dot_dimension_numbers<[1], [0], [0], [1], [0, 0, 1, 1], [], []>} : vector<16x128xbf16>, vector<128x128xbf16>, vector<16x128xf32> -> vector<16x128xf32>
    %c0_24 = arith.constant 0 : index
    %c0_25 = arith.constant 0 : index
    %26 = vector.load %arg7[%c0_24, %c0_25] : memref<1x128xf32, #tpu.memory_space<vmem>>, vector<1x128xf32>
    %27 = vector.broadcast %26 : vector<1x128xf32> to vector<16x128xf32>
    %28 = arith.addf %25, %27 : vector<16x128xf32>
    %c0_26 = arith.constant 0 : index
    %c0_27 = arith.constant 0 : index
    %29 = vector.load %arg9[%c0_26, %c0_27] : memref<16x128xf32, #tpu.memory_space<vmem>>, vector<16x128xf32>
    tpu.vector_store %arg9[%c0_26, %c0_27], %28 {strides = array<i32>} : memref<16x128xf32, #tpu.memory_space<vmem>>, vector<16x128xf32>,
    return
  }
  func.func @transform_0(%arg0: i32, %arg1: i32) -> (i32, i32) {
    %c0_i32 = arith.constant 0 : i32
    return %arg0, %arg1 : i32, i32
  }
  func.func @transform_1(%arg0: i32, %arg1: i32) -> (i32, i32) {
    %c0_i32 = arith.constant 0 : i32
    return %arg0, %arg1 : i32, i32
  }
  func.func @transform_2(%arg0: i32, %arg1: i32) -> (i32, i32) {
    %c0_i32 = arith.constant 0 : i32
    %c0_i32_0 = arith.constant 0 : i32
    return %arg1, %c0_i32 : i32, i32
  }
  func.func @transform_3(%arg0: i32, %arg1: i32) -> (i32, i32) {
    %c0_i32 = arith.constant 0 : i32
    %c0_i32_0 = arith.constant 0 : i32
    %c0_i32_1 = arith.constant 0 : i32
    return %c0_i32, %c0_i32_0 : i32, i32
  }
  func.func @transform_4(%arg0: i32, %arg1: i32) -> (i32, i32) {
    %c0_i32 = arith.constant 0 : i32
    %c0_i32_0 = arith.constant 0 : i32
    %c0_i32_1 = arith.constant 0 : i32
    return %c0_i32, %c0_i32_0 : i32, i32
  }
  func.func @transform_5(%arg0: i32, %arg1: i32) -> (i32, i32) {
    %c0_i32 = arith.constant 0 : i32
    %c0_i32_0 = arith.constant 0 : i32
    %c0_i32_1 = arith.constant 0 : i32
    return %c0_i32, %c0_i32_0 : i32, i32
  }
  func.func @transform_6(%arg0: i32, %arg1: i32) -> (i32, i32) {
    %c0_i32 = arith.constant 0 : i32
    %c0_i32_0 = arith.constant 0 : i32
    return %arg0, %c0_i32 : i32, i32
  }
  func.func @transform_7(%arg0: i32, %arg1: i32) -> (i32, i32) {
    %c0_i32 = arith.constant 0 : i32
    %c0_i32_0 = arith.constant 0 : i32
    return %arg0, %c0_i32 : i32, i32
  }
}

</mosaic_0001>

<llo_original>
// kernel: _siamese_forward_pair.1
$region0: #{_siamese_forward_pair.1}
  #allocation0 [shape = 'u32[]', space=smem, size = 0x4, offset = 0x4, fixed_abs, tag = 'smem constant byte address 0x4 - core index']
  #allocation1 [shape = 'u32[144,128]{1,0:T(1,128)}', space=vmem, size = 0x12000, scoped, tag = 'internal scratch']
  %s0 = inlined_call_operand.vmem [shape: bf16[16,1024], index: 0, kind: input, shape index: {}]
  %s1 = inlined_call_operand.vmem [shape: bf16[16,1024], index: 1, kind: input, shape index: {}]
  %s2 = inlined_call_operand.vmem [shape: bf16[1024,128], index: 2, kind: input, shape index: {}]
  %s3 = inlined_call_operand.vmem [shape: f32[1,128], index: 3, kind: input, shape index: {}]
  %s4 = inlined_call_operand.vmem [shape: bf16[128,128], index: 4, kind: input, shape index: {}]
  %s5 = inlined_call_operand.vmem [shape: f32[1,128], index: 5, kind: input, shape index: {}]
  %s6 = inlined_call_operand.vmem [shape: f32[16,128], index: 6, kind: output, shape index: {0}]
  %s7 = inlined_call_operand.vmem [shape: f32[16,128], index: 7, kind: output, shape index: {1}]
  %8 = xla_tuple %s6, %s7
  %s9 = sld [smem:[#allocation0]]
  $region42: #{_siamese_forward_pair.1} parent=0
    _
  %s11 = ssub.s32 1, %s9
  %s12 = scalar_select 0, %s11, %s9
  // Predicated region
  $region2: #{_siamese_forward_pair.1} parent=0 // pred_check
    _
  $region3: #{_siamese_forward_pair.1} parent=0 // pred_check_branch
    %14 = sbr.rel (0) target = $region5
  $region4: #{_siamese_forward_pair.1} parent=0 // pred_region
    _
  $region5: #{_siamese_forward_pair.1} parent=0 // pred_fallthru
    _
  // Predicated region
  $region6: #{_siamese_forward_pair.1} parent=0 // pred_check
    _
  $region7: #{_siamese_forward_pair.1} parent=0 // pred_check_branch
    %16 = sbr.rel (0) target = $region9
  $region8: #{_siamese_forward_pair.1} parent=0 // pred_region
    _
  $region9: #{_siamese_forward_pair.1} parent=0 // pred_fallthru
    _
  // Predicated region
  $region10: #{_siamese_forward_pair.1} parent=0 // pred_check
    _
  $region11: #{_siamese_forward_pair.1} parent=0 // pred_check_branch
    %18 = sbr.rel (0) target = $region13
  $region12: #{_siamese_forward_pair.1} parent=0 // pred_region
    _
  $region13: #{_siamese_forward_pair.1} parent=0 // pred_fallthru
    _
  // Predicated region
  $region14: #{_siamese_forward_pair.1} parent=0 // pred_check
    _
  $region15: #{_siamese_forward_pair.1} parent=0 // pred_check_branch
    %20 = sbr.rel (0) target = $region17
  $region16: #{_siamese_forward_pair.1} parent=0 // pred_region
    _
  $region17: #{_siamese_forward_pair.1} parent=0 // pred_fallthru
    _
  // Predicated region
  $region18: #{_siamese_forward_pair.1} parent=0 // pred_check
    _
  $region19: #{_siamese_forward_pair.1} parent=0 // pred_check_branch
    %22 = sbr.rel (0) target = $region21
  $region20: #{_siamese_forward_pair.1} parent=0 // pred_region
    _
  $region21: #{_siamese_forward_pair.1} parent=0 // pred_fallthru
    _
  // Predicated region
  $region22: #{_siamese_forward_pair.1} parent=0 // pred_check
    _
  $region23: #{_siamese_forward_pair.1} parent=0 // pred_check_branch
    %24 = sbr.rel (0) target = $region25
  $region24: #{_siamese_forward_pair.1} parent=0 // pred_region
    _
  $region25: #{_siamese_forward_pair.1} parent=0 // pred_fallthru
    _
  %v26 = vld [vmem:[%s0] sm:$0xff]
  %v27 = vld [vmem:[%s0 + $0x8] sm:$0xff]
  %v28 = vld [vmem:[%s0 + $0x10] sm:$0xff]
  %v29 = vld [vmem:[%s0 + $0x18] sm:$0xff]
  %v30 = vld [vmem:[%s0 + $0x20] sm:$0xff]
  %v31 = vld [vmem:[%s0 + $0x28] sm:$0xff]
  %v32 = vld [vmem:[%s0 + $0x30] sm:$0xff]
  %v33 = vld [vmem:[%s0 + $0x38] sm:$0xff]
  %v34 = vld [vmem:[%s2] sm:$0xf]
  %v35 = vld [vmem:[%s2 + $0x4] sm:$0xf]
  %v36 = vld [vmem:[%s2 + $0x8] sm:$0xf]
  %v37 = vld [vmem:[%s2 + $0xc] sm:$0xf]
  %v38 = vld [vmem:[%s2 + $0x10] sm:$0xf]
  %v39 = vld [vmem:[%s2 + $0x14] sm:$0xf]
  %v40 = vld [vmem:[%s2 + $0x18] sm:$0xf]
  %v41 = vld [vmem:[%s2 + $0x1c] sm:$0xf]
  %v42 = vld [vmem:[%s2 + $0x20] sm:$0xf]
  %v43 = vld [vmem:[%s2 + $0x24] sm:$0xf]
  %v44 = vld [vmem:[%s2 + $0x28] sm:$0xf]
  %v45 = vld [vmem:[%s2 + $0x2c] sm:$0xf]
  %v46 = vld [vmem:[%s2 + $0x30] sm:$0xf]
  %v47 = vld [vmem:[%s2 + $0x34] sm:$0xf]
  %v48 = vld [vmem:[%s2 + $0x38] sm:$0xf]
  %v49 = vld [vmem:[%s2 + $0x3c] sm:$0xf]
  %v50 = vld [vmem:[%s2 + $0x40] sm:$0xf]
  %v51 = vld [vmem:[%s2 + $0x44] sm:$0xf]
  %v52 = vld [vmem:[%s2 + $0x48] sm:$0xf]
  %v53 = vld [vmem:[%s2 + $0x4c] sm:$0xf]
  %v54 = vld [vmem:[%s2 + $0x50] sm:$0xf]
  %v55 = vld [vmem:[%s2 + $0x54] sm:$0xf]
  %v56 = vld [vmem:[%s2 + $0x58] sm:$0xf]
  %v57 = vld [vmem:[%s2 + $0x5c] sm:$0xf]
  %v58 = vld [vmem:[%s2 + $0x60] sm:$0xf]
  %v59 = vld [vmem:[%s2 + $0x64] sm:$0xf]
  %v60 = vld [vmem:[%s2 + $0x68] sm:$0xf]
  %v61 = vld [vmem:[%s2 + $0x6c] sm:$0xf]
  %v62 = vld [vmem:[%s2 + $0x70] sm:$0xf]
  %v63 = vld [vmem:[%s2 + $0x74] sm:$0xf]
  %v64 = vld [vmem:[%s2 + $0x78] sm:$0xf]
  %v65 = vld [vmem:[%s2 + $0x7c] sm:$0xf]
  %v66 = vld [vmem:[%s2 + $0x80] sm:$0xf]
  %v67 = vld [vmem:[%s2 + $0x84] sm:$0xf]
  %v68 = vld [vmem:[%s2 + $0x88] sm:$0xf]
  %v69 = vld [vmem:[%s2 + $0x8c] sm:$0xf]
  %v70 = vld [vmem:[%s2 + $0x90] sm:$0xf]
  %v71 = vld [vmem:[%s2 + $0x94] sm:$0xf]
  %v72 = vld [vmem:[%s2 + $0x98] sm:$0xf]
  %v73 = vld [vmem:[%s2 + $0x9c] sm:$0xf]
  %v74 = vld [vmem:[%s2 + $0xa0] sm:$0xf]
  %v75 = vld [vmem:[%s2 + $0xa4] sm:$0xf]
  %v76 = vld [vmem:[%s2 + $0xa8] sm:$0xf]
  %v77 = vld [vmem:[%s2 + $0xac] sm:$0xf]
  %v78 = vld [vmem:[%s2 + $0xb0] sm:$0xf]
  %v79 = vld [vmem:[%s2 + $0xb4] sm:$0xf]
  %v80 = vld [vmem:[%s2 + $0xb8] sm:$0xf]
  %v81 = vld [vmem:[%s2 + $0xbc] sm:$0xf]
  %v82 = vld [vmem:[%s2 + $0xc0] sm:$0xf]
  %v83 = vld [vmem:[%s2 + $0xc4] sm:$0xf]
  %v84 = vld [vmem:[%s2 + $0xc8] sm:$0xf]
  %v85 = vld [vmem:[%s2 + $0xcc] sm:$0xf]
  %v86 = vld [vmem:[%s2 + $0xd0] sm:$0xf]
  %v87 = vld [vmem:[%s2 + $0xd4] sm:$0xf]
  %v88 = vld [vmem:[%s2 + $0xd8] sm:$0xf]
  %v89 = vld [vmem:[%s2 + $0xdc] sm:$0xf]
  %v90 = vld [vmem:[%s2 + $0xe0] sm:$0xf]
  %v91 = vld [vmem:[%s2 + $0xe4] sm:$0xf]
  %v92 = vld [vmem:[%s2 + $0xe8] sm:$0xf]
  %v93 = vld [vmem:[%s2 + $0xec] sm:$0xf]
  %v94 = vld [vmem:[%s2 + $0xf0] sm:$0xf]
  %v95 = vld [vmem:[%s2 + $0xf4] sm:$0xf]
  %v96 = vld [vmem:[%s2 + $0xf8] sm:$0xf]
  %v97 = vld [vmem:[%s2 + $0xfc] sm:$0xf]
  %v98 = vld [vmem:[%s2 + $0x100] sm:$0xf]
  %v99 = vld [vmem:[%s2 + $0x104] sm:$0xf]
  %v100 = vld [vmem:[%s2 + $0x108] sm:$0xf]
  %v101 = vld [vmem:[%s2 + $0x10c] sm:$0xf]
  %v102 = vld [vmem:[%s2 + $0x110] sm:$0xf]
  %v103 = vld [vmem:[%s2 + $0x114] sm:$0xf]
  %v104 = vld [vmem:[%s2 + $0x118] sm:$0xf]
  %v105 = vld [vmem:[%s2 + $0x11c] sm:$0xf]
  %v106 = vld [vmem:[%s2 + $0x120] sm:$0xf]
  %v107 = vld [vmem:[%s2 + $0x124] sm:$0xf]
  %v108 = vld [vmem:[%s2 + $0x128] sm:$0xf]
  %v109 = vld [vmem:[%s2 + $0x12c] sm:$0xf]
  %v110 = vld [vmem:[%s2 + $0x130] sm:$0xf]
  %v111 = vld [vmem:[%s2 + $0x134] sm:$0xf]
  %v112 = vld [vmem:[%s2 + $0x138] sm:$0xf]
  %v113 = vld [vmem:[%s2 + $0x13c] sm:$0xf]
  %v114 = vld [vmem:[%s2 + $0x140] sm:$0xf]
  %v115 = vld [vmem:[%s2 + $0x144] sm:$0xf]
  %v116 = vld [vmem:[%s2 + $0x148] sm:$0xf]
  %v117 = vld [vmem:[%s2 + $0x14c] sm:$0xf]
  %v118 = vld [vmem:[%s2 + $0x150] sm:$0xf]
  %v119 = vld [vmem:[%s2 + $0x154] sm:$0xf]
  %v120 = vld [vmem:[%s2 + $0x158] sm:$0xf]
  %v121 = vld [vmem:[%s2 + $0x15c] sm:$0xf]
  %v122 = vld [vmem:[%s2 + $0x160] sm:$0xf]
  %v123 = vld [vmem:[%s2 + $0x164] sm:$0xf]
  %v124 = vld [vmem:[%s2 + $0x168] sm:$0xf]
  %v125 = vld [vmem:[%s2 + $0x16c] sm:$0xf]
  %v126 = vld [vmem:[%s2 + $0x170] sm:$0xf]
  %v127 = vld [vmem:[%s2 + $0x174] sm:$0xf]
  %v128 = vld [vmem:[%s2 + $0x178] sm:$0xf]
  %v129 = vld [vmem:[%s2 + $0x17c] sm:$0xf]
  %v130 = vld [vmem:[%s2 + $0x180] sm:$0xf]
  %v131 = vld [vmem:[%s2 + $0x184] sm:$0xf]
  %v132 = vld [vmem:[%s2 + $0x188] sm:$0xf]
  %v133 = vld [vmem:[%s2 + $0x18c] sm:$0xf]
  %v134 = vld [vmem:[%s2 + $0x190] sm:$0xf]
  %v135 = vld [vmem:[%s2 + $0x194] sm:$0xf]
  %v136 = vld [vmem:[%s2 + $0x198] sm:$0xf]
  %v137 = vld [vmem:[%s2 + $0x19c] sm:$0xf]
  %v138 = vld [vmem:[%s2 + $0x1a0] sm:$0xf]
  %v139 = vld [vmem:[%s2 + $0x1a4] sm:$0xf]
  %v140 = vld [vmem:[%s2 + $0x1a8] sm:$0xf]
  %v141 = vld [vmem:[%s2 + $0x1ac] sm:$0xf]
  %v142 = vld [vmem:[%s2 + $0x1b0] sm:$0xf]
  %v143 = vld [vmem:[%s2 + $0x1b4] sm:$0xf]
  %v144 = vld [vmem:[%s2 + $0x1b8] sm:$0xf]
  %v145 = vld [vmem:[%s2 + $0x1bc] sm:$0xf]
  %v146 = vld [vmem:[%s2 + $0x1c0] sm:$0xf]
  %v147 = vld [vmem:[%s2 + $0x1c4] sm:$0xf]
  %v148 = vld [vmem:[%s2 + $0x1c8] sm:$0xf]
  %v149 = vld [vmem:[%s2 + $0x1cc] sm:$0xf]
  %v150 = vld [vmem:[%s2 + $0x1d0] sm:$0xf]
  %v151 = vld [vmem:[%s2 + $0x1d4] sm:$0xf]
  %v152 = vld [vmem:[%s2 + $0x1d8] sm:$0xf]
  %v153 = vld [vmem:[%s2 + $0x1dc] sm:$0xf]
  %v154 = vld [vmem:[%s2 + $0x1e0] sm:$0xf]
  %v155 = vld [vmem:[%s2 + $0x1e4] sm:$0xf]
  %v156 = vld [vmem:[%s2 + $0x1e8] sm:$0xf]
  %v157 = vld [vmem:[%s2 + $0x1ec] sm:$0xf]
  %v158 = vld [vmem:[%s2 + $0x1f0] sm:$0xf]
  %v159 = vld [vmem:[%s2 + $0x1f4] sm:$0xf]
  %v160 = vld [vmem:[%s2 + $0x1f8] sm:$0xf]
  %v161 = vld [vmem:[%s2 + $0x1fc] sm:$0xf]
  %v162 = vld [vmem:[%s3] sm:$0x1]
  %v164 = vlaneseq
  %v165 = vshrl.u32 %v164, 7
  %v166 = vsub.s32 0, %v165
  %v167 = vrot.slane %v162, %v166
  %v177 = vunpack.c.l.b16 %v26
  %v178 = vunpack.c.h.b16 %v26
  %v179 = vunpack.c.l.b16 %v27
  %v180 = vunpack.c.h.b16 %v27
  %v181 = vunpack.c.l.b16 %v28
  %v182 = vunpack.c.h.b16 %v28
  %v183 = vunpack.c.l.b16 %v29
  %v184 = vunpack.c.h.b16 %v29
  %v185 = vunpack.c.l.b16 %v30
  %v186 = vunpack.c.h.b16 %v30
  %v187 = vunpack.c.l.b16 %v31
  %v188 = vunpack.c.h.b16 %v31
  %v189 = vunpack.c.l.b16 %v32
  %v190 = vunpack.c.h.b16 %v32
  %v191 = vunpack.c.l.b16 %v33
  %v192 = vunpack.c.h.b16 %v33
  %v193 = vpack.c.b16 %v185, %v177
  %v194 = vpack.c.b16 %v186, %v178
  %v195 = vpack.c.b16 %v187, %v179
  %v196 = vpack.c.b16 %v188, %v180
  %v197 = vpack.c.b16 %v189, %v181
  %v198 = vpack.c.b16 %v190, %v182
  %v199 = vpack.c.b16 %v191, %v183
  %v200 = vpack.c.b16 %v192, %v184
  %v337 = vunpack.c.l.b16 %v34
  %v338 = vunpack.c.l.b16 %v35
  %v339 = vunpack.c.l.b16 %v36
  %v340 = vunpack.c.l.b16 %v37
  %v341 = vunpack.c.l.b16 %v38
  %v342 = vunpack.c.l.b16 %v39
  %v343 = vunpack.c.l.b16 %v40
  %v344 = vunpack.c.l.b16 %v41
  %v345 = vunpack.c.l.b16 %v42
  %v346 = vunpack.c.l.b16 %v43
  %v347 = vunpack.c.l.b16 %v44
  %v348 = vunpack.c.l.b16 %v45
  %v349 = vunpack.c.l.b16 %v46
  %v350 = vunpack.c.l.b16 %v47
  %v351 = vunpack.c.l.b16 %v48
  %v352 = vunpack.c.l.b16 %v49
  %v353 = vunpack.c.l.b16 %v50
  %v354 = vunpack.c.l.b16 %v51
  %v355 = vunpack.c.l.b16 %v52
  %v356 = vunpack.c.l.b16 %v53
  %v357 = vunpack.c.l.b16 %v54
  %v358 = vunpack.c.l.b16 %v55
  %v359 = vunpack.c.l.b16 %v56
  %v360 = vunpack.c.l.b16 %v57
  %v361 = vunpack.c.l.b16 %v58
  %v362 = vunpack.c.l.b16 %v59
  %v363 = vunpack.c.l.b16 %v60
  %v364 = vunpack.c.l.b16 %v61
  %v365 = vunpack.c.l.b16 %v62
  %v366 = vunpack.c.l.b16 %v63
  %v367 = vunpack.c.l.b16 %v64
  %v368 = vunpack.c.l.b16 %v65
  %v369 = vunpack.c.l.b16 %v66
  %v370 = vunpack.c.l.b16 %v67
  %v371 = vunpack.c.l.b16 %v68
  %v372 = vunpack.c.l.b16 %v69
  %v373 = vunpack.c.l.b16 %v70
  %v374 = vunpack.c.l.b16 %v71
  %v375 = vunpack.c.l.b16 %v72
  %v376 = vunpack.c.l.b16 %v73
  %v377 = vunpack.c.l.b16 %v74
  %v378 = vunpack.c.l.b16 %v75
  %v379 = vunpack.c.l.b16 %v76
  %v380 = vunpack.c.l.b16 %v77
  %v381 = vunpack.c.l.b16 %v78
  %v382 = vunpack.c.l.b16 %v79
  %v383 = vunpack.c.l.b16 %v80
  %v384 = vunpack.c.l.b16 %v81
  %v385 = vunpack.c.l.b16 %v82
  %v386 = vunpack.c.l.b16 %v83
  %v387 = vunpack.c.l.b16 %v84
  %v388 = vunpack.c.l.b16 %v85
  %v389 = vunpack.c.l.b16 %v86
  %v390 = vunpack.c.l.b16 %v87
  %v391 = vunpack.c.l.b16 %v88
  %v392 = vunpack.c.l.b16 %v89
  %v393 = vunpack.c.l.b16 %v90
  %v394 = vunpack.c.l.b16 %v91
  %v395 = vunpack.c.l.b16 %v92
  %v396 = vunpack.c.l.b16 %v93
  %v397 = vunpack.c.l.b16 %v94
  %v398 = vunpack.c.l.b16 %v95
  %v399 = vunpack.c.l.b16 %v96
  %v400 = vunpack.c.l.b16 %v97
  %v401 = vunpack.c.l.b16 %v98
  %v402 = vunpack.c.l.b16 %v99
  %v403 = vunpack.c.l.b16 %v100
  %v404 = vunpack.c.l.b16 %v101
  %v405 = vunpack.c.l.b16 %v102
  %v406 = vunpack.c.l.b16 %v103
  %v407 = vunpack.c.l.b16 %v104
  %v408 = vunpack.c.l.b16 %v105
  %v409 = vunpack.c.l.b16 %v106
  %v410 = vunpack.c.l.b16 %v107
  %v411 = vunpack.c.l.b16 %v108
  %v412 = vunpack.c.l.b16 %v109
  %v413 = vunpack.c.l.b16 %v110
  %v414 = vunpack.c.l.b16 %v111
  %v415 = vunpack.c.l.b16 %v112
  %v416 = vunpack.c.l.b16 %v113
  %v417 = vunpack.c.l.b16 %v114
  %v418 = vunpack.c.l.b16 %v115
  %v419 = vunpack.c.l.b16 %v116
  %v420 = vunpack.c.l.b16 %v117
  %v421 = vunpack.c.l.b16 %v118
  %v422 = vunpack.c.l.b16 %v119
  %v423 = vunpack.c.l.b16 %v120
  %v424 = vunpack.c.l.b16 %v121
  %v425 = vunpack.c.l.b16 %v122
  %v426 = vunpack.c.l.b16 %v123
  %v427 = vunpack.c.l.b16 %v124
  %v428 = vunpack.c.l.b16 %v125
  %v429 = vunpack.c.l.b16 %v126
  %v430 = vunpack.c.l.b16 %v127
  %v431 = vunpack.c.l.b16 %v128
  %v432 = vunpack.c.l.b16 %v129
  %v433 = vunpack.c.l.b16 %v130
  %v434 = vunpack.c.l.b16 %v131
  %v435 = vunpack.c.l.b16 %v132
  %v436 = vunpack.c.l.b16 %v133
  %v437 = vunpack.c.l.b16 %v134
  %v438 = vunpack.c.l.b16 %v135
  %v439 = vunpack.c.l.b16 %v136
  %v440 = vunpack.c.l.b16 %v137
  %v441 = vunpack.c.l.b16 %v138
  %v442 = vunpack.c.l.b16 %v139
  %v443 = vunpack.c.l.b16 %v140
  %v444 = vunpack.c.l.b16 %v141
  %v445 = vunpack.c.l.b16 %v142
  %v446 = vunpack.c.l.b16 %v143
  %v447 = vunpack.c.l.b16 %v144
  %v448 = vunpack.c.l.b16 %v145
  %v449 = vunpack.c.l.b16 %v146
  %v450 = vunpack.c.l.b16 %v147
  %v451 = vunpack.c.l.b16 %v148
  %v452 = vunpack.c.l.b16 %v149
  %v453 = vunpack.c.l.b16 %v150
  %v454 = vunpack.c.l.b16 %v151
  %v455 = vunpack.c.l.b16 %v152
  %v456 = vunpack.c.l.b16 %v153
  %v457 = vunpack.c.l.b16 %v154
  %v458 = vunpack.c.l.b16 %v155
  %v459 = vunpack.c.l.b16 %v156
  %v460 = vunpack.c.l.b16 %v157
  %v461 = vunpack.c.l.b16 %v158
  %v462 = vunpack.c.l.b16 %v159
  %v463 = vunpack.c.l.b16 %v160
  %v464 = vunpack.c.l.b16 %v161
  %v465 = vpack.c.b16 %v338, %v337
  %v466 = vpack.c.b16 %v340, %v339
  %v467 = vpack.c.b16 %v342, %v341
  %v468 = vpack.c.b16 %v344, %v343
  %v469 = vpack.c.b16 %v346, %v345
  %v470 = vpack.c.b16 %v348, %v347
  %v471 = vpack.c.b16 %v350, %v349
  %v472 = vpack.c.b16 %v352, %v351
  %v473 = vpack.c.b16 %v354, %v353
  %v474 = vpack.c.b16 %v356, %v355
  %v475 = vpack.c.b16 %v358, %v357
  %v476 = vpack.c.b16 %v360, %v359
  %v477 = vpack.c.b16 %v362, %v361
  %v478 = vpack.c.b16 %v364, %v363
  %v479 = vpack.c.b16 %v366, %v365
  %v480 = vpack.c.b16 %v368, %v367
  %v481 = vpack.c.b16 %v370, %v369
  %v482 = vpack.c.b16 %v372, %v371
  %v483 = vpack.c.b16 %v374, %v373
  %v484 = vpack.c.b16 %v376, %v375
  %v485 = vpack.c.b16 %v378, %v377
  %v486 = vpack.c.b16 %v380, %v379
  %v487 = vpack.c.b16 %v382, %v381
  %v488 = vpack.c.b16 %v384, %v383
  %v489 = vpack.c.b16 %v386, %v385
  %v490 = vpack.c.b16 %v388, %v387
  %v491 = vpack.c.b16 %v390, %v389
  %v492 = vpack.c.b16 %v392, %v391
  %v493 = vpack.c.b16 %v394, %v393
  %v494 = vpack.c.b16 %v396, %v395
  %v495 = vpack.c.b16 %v398, %v397
  %v496 = vpack.c.b16 %v400, %v399
  %v497 = vpack.c.b16 %v402, %v401
  %v498 = vpack.c.b16 %v404, %v403
  %v499 = vpack.c.b16 %v406, %v405
  %v500 = vpack.c.b16 %v408, %v407
  %v501 = vpack.c.b16 %v410, %v409
  %v502 = vpack.c.b16 %v412, %v411
  %v503 = vpack.c.b16 %v414, %v413
  %v504 = vpack.c.b16 %v416, %v415
  %v505 = vpack.c.b16 %v418, %v417
  %v506 = vpack.c.b16 %v420, %v419
  %v507 = vpack.c.b16 %v422, %v421
  %v508 = vpack.c.b16 %v424, %v423
  %v509 = vpack.c.b16 %v426, %v425
  %v510 = vpack.c.b16 %v428, %v427
  %v511 = vpack.c.b16 %v430, %v429
  %v512 = vpack.c.b16 %v432, %v431
  %v513 = vpack.c.b16 %v434, %v433
  %v514 = vpack.c.b16 %v436, %v435
  %v515 = vpack.c.b16 %v438, %v437
  %v516 = vpack.c.b16 %v440, %v439
  %v517 = vpack.c.b16 %v442, %v441
  %v518 = vpack.c.b16 %v444, %v443
  %v519 = vpack.c.b16 %v446, %v445
  %v520 = vpack.c.b16 %v448, %v447
  %v521 = vpack.c.b16 %v450, %v449
  %v522 = vpack.c.b16 %v452, %v451
  %v523 = vpack.c.b16 %v454, %v453
  %v524 = vpack.c.b16 %v456, %v455
  %v525 = vpack.c.b16 %v458, %v457
  %v526 = vpack.c.b16 %v460, %v459
  %v527 = vpack.c.b16 %v462, %v461
  %v528 = vpack.c.b16 %v464, %v463
  %593 = vmatprep.subr.bf16.mxu0 0
  %594 = vmatpush1.bf16.msra.mxu0 %v465
  %595 = vmatprep.subr.bf16.mxu0 0
  %596 = vmatpush1.bf16.msra.mxu0 %v466
  %597 = vmatprep.subr.bf16.mxu0 0
  %598 = vmatpush1.bf16.msra.mxu0 %v467
  %599 = vmatprep.subr.bf16.mxu0 0
  %600 = vmatpush1.bf16.msra.mxu0 %v468
  %601 = vmatprep.subr.bf16.mxu0 0
  %602 = vmatpush1.bf16.msra.mxu0 %v469
  %603 = vmatprep.subr.bf16.mxu0 0
  %604 = vmatpush1.bf16.msra.mxu0 %v470
  %605 = vmatprep.subr.bf16.mxu0 0
  %606 = vmatpush1.bf16.msra.mxu0 %v471
  %607 = vmatprep.subr.bf16.mxu0 0
  %608 = vmatpush1.bf16.msra.mxu0 %v472
  %609 = vmatprep.subr.bf16.mxu0 0
  %610 = vmatpush1.bf16.msra.mxu0 %v473
  %611 = vmatprep.subr.bf16.mxu0 0
  %612 = vmatpush1.bf16.msra.mxu0 %v474
  %613 = vmatprep.subr.bf16.mxu0 0
  %614 = vmatpush1.bf16.msra.mxu0 %v475
  %615 = vmatprep.subr.bf16.mxu0 0
  %616 = vmatpush1.bf16.msra.mxu0 %v476
  %617 = vmatprep.subr.bf16.mxu0 0
  %618 = vmatpush1.bf16.msra.mxu0 %v477
  %619 = vmatprep.subr.bf16.mxu0 0
  %620 = vmatpush1.bf16.msra.mxu0 %v478
  %621 = vmatprep.subr.bf16.mxu0 0
  %622 = vmatpush1.bf16.msra.mxu0 %v479
  %623 = vmatprep.subr.bf16.mxu0 0
  %624 = vmatpush1.bf16.msra.mxu0 %v480
  %625 = vmatprep.mubr.bf16.mxu0 %v194
  %626 = vmatmul.mubr.bf16.gmra.mrb[0].mxu0 %v193
  %v627 = vpop.f32.mrb[0].mxu0
  %v628 = vadd.f32 %v167, %v627
  %v629 = vpop.f32.mrb[0].mxu0
  %v630 = vpop.f32.mrb[0].mxu0
  %v631 = vadd.f32 %v167, %v630
  %v632 = vpop.f32.mrb[0].mxu0
  %633 = vdwg.mxu0
  %634 = vmatprep.subr.bf16.mxu0 0
  %635 = vmatpush1.bf16.msra.mxu0 %v481
  %636 = vmatprep.subr.bf16.mxu0 0
  %637 = vmatpush1.bf16.msra.mxu0 %v482
  %638 = vmatprep.subr.bf16.mxu0 0
  %639 = vmatpush1.bf16.msra.mxu0 %v483
  %640 = vmatprep.subr.bf16.mxu0 0
  %641 = vmatpush1.bf16.msra.mxu0 %v484
  %642 = vmatprep.subr.bf16.mxu0 0
  %643 = vmatpush1.bf16.msra.mxu0 %v485
  %644 = vmatprep.subr.bf16.mxu0 0
  %645 = vmatpush1.bf16.msra.mxu0 %v486
  %646 = vmatprep.subr.bf16.mxu0 0
  %647 = vmatpush1.bf16.msra.mxu0 %v487
  %648 = vmatprep.subr.bf16.mxu0 0
  %649 = vmatpush1.bf16.msra.mxu0 %v488
  %650 = vmatprep.subr.bf16.mxu0 0
  %651 = vmatpush1.bf16.msra.mxu0 %v489
  %652 = vmatprep.subr.bf16.mxu0 0
  %653 = vmatpush1.bf16.msra.mxu0 %v490
  %654 = vmatprep.subr.bf16.mxu0 0
  %655 = vmatpush1.bf16.msra.mxu0 %v491
  %656 = vmatprep.subr.bf16.mxu0 0
  %657 = vmatpush1.bf16.msra.mxu0 %v492
  %658 = vmatprep.subr.bf16.mxu0 0
  %659 = vmatpush1.bf16.msra.mxu0 %v493
  %660 = vmatprep.subr.bf16.mxu0 0
  %661 = vmatpush1.bf16.msra.mxu0 %v494
  %662 = vmatprep.subr.bf16.mxu0 0
  %663 = vmatpush1.bf16.msra.mxu0 %v495
  %664 = vmatprep.subr.bf16.mxu0 0
  %665 = vmatpush1.bf16.msra.mxu0 %v496
  %666 = vmatprep.mubr.bf16.mxu0 %v196
  %667 = vmatmul.mubr.bf16.gmra.mrb[0].mxu0 %v195
  %v668 = vpop.f32.mrb[0].mxu0
  %v669 = vadd.f32 %v628, %v668
  %v670 = vpop.f32.mrb[0].mxu0
  %v671 = vpop.f32.mrb[0].mxu0
  %v672 = vadd.f32 %v631, %v671
  %v673 = vpop.f32.mrb[0].mxu0
  %674 = vdwg.mxu0
  %675 = vmatprep.subr.bf16.mxu0 0
  %676 = vmatpush1.bf16.msra.mxu0 %v497
  %677 = vmatprep.subr.bf16.mxu0 0
  %678 = vmatpush1.bf16.msra.mxu0 %v498
  %679 = vmatprep.subr.bf16.mxu0 0
  %680 = vmatpush1.bf16.msra.mxu0 %v499
  %681 = vmatprep.subr.bf16.mxu0 0
  %682 = vmatpush1.bf16.msra.mxu0 %v500
  %683 = vmatprep.subr.bf16.mxu0 0
  %684 = vmatpush1.bf16.msra.mxu0 %v501
  %685 = vmatprep.subr.bf16.mxu0 0
  %686 = vmatpush1.bf16.msra.mxu0 %v502
  %687 = vmatprep.subr.bf16.mxu0 0
  %688 = vmatpush1.bf16.msra.mxu0 %v503
  %689 = vmatprep.subr.bf16.mxu0 0
  %690 = vmatpush1.bf16.msra.mxu0 %v504
  %691 = vmatprep.subr.bf16.mxu0 0
  %692 = vmatpush1.bf16.msra.mxu0 %v505
  %693 = vmatprep.subr.bf16.mxu0 0
  %694 = vmatpush1.bf16.msra.mxu0 %v506
  %695 = vmatprep.subr.bf16.mxu0 0
  %696 = vmatpush1.bf16.msra.mxu0 %v507
  %697 = vmatprep.subr.bf16.mxu0 0
  %698 = vmatpush1.bf16.msra.mxu0 %v508
  %699 = vmatprep.subr.bf16.mxu0 0
  %700 = vmatpush1.bf16.msra.mxu0 %v509
  %701 = vmatprep.subr.bf16.mxu0 0
  %702 = vmatpush1.bf16.msra.mxu0 %v510
  %703 = vmatprep.subr.bf16.mxu0 0
  %704 = vmatpush1.bf16.msra.mxu0 %v511
  %705 = vmatprep.subr.bf16.mxu0 0
  %706 = vmatpush1.bf16.msra.mxu0 %v512
  %707 = vmatprep.mubr.bf16.mxu0 %v198
  %708 = vmatmul.mubr.bf16.gmra.mrb[0].mxu0 %v197
  %v709 = vpop.f32.mrb[0].mxu0
  %v710 = vadd.f32 %v669, %v709
  %v711 = vpop.f32.mrb[0].mxu0
  %v712 = vpop.f32.mrb[0].mxu0
  %v713 = vadd.f32 %v672, %v712
  %v714 = vpop.f32.mrb[0].mxu0
  %715 = vdwg.mxu0
  %716 = vmatprep.subr.bf16.mxu0 0
  %717 = vmatpush1.bf16.msra.mxu0 %v513
  %718 = vmatprep.subr.bf16.mxu0 0
  %719 = vmatpush1.bf16.msra.mxu0 %v514
  %720 = vmatprep.subr.bf16.mxu0 0
  %721 = vmatpush1.bf16.msra.mxu0 %v515
  %722 = vmatprep.subr.bf16.mxu0 0
  %723 = vmatpush1.bf16.msra.mxu0 %v516
  %724 = vmatprep.subr.bf16.mxu0 0
  %725 = vmatpush1.bf16.msra.mxu0 %v517
  %726 = vmatprep.subr.bf16.mxu0 0
  %727 = vmatpush1.bf16.msra.mxu0 %v518
  %728 = vmatprep.subr.bf16.mxu0 0
  %729 = vmatpush1.bf16.msra.mxu0 %v519
  %730 = vmatprep.subr.bf16.mxu0 0
  %731 = vmatpush1.bf16.msra.mxu0 %v520
  %732 = vmatprep.subr.bf16.mxu0 0
  %733 = vmatpush1.bf16.msra.mxu0 %v521
  %734 = vmatprep.subr.bf16.mxu0 0
  %735 = vmatpush1.bf16.msra.mxu0 %v522
  %736 = vmatprep.subr.bf16.mxu0 0
  %737 = vmatpush1.bf16.msra.mxu0 %v523
  %738 = vmatprep.subr.bf16.mxu0 0
  %739 = vmatpush1.bf16.msra.mxu0 %v524
  %740 = vmatprep.subr.bf16.mxu0 0
  %741 = vmatpush1.bf16.msra.mxu0 %v525
  %742 = vmatprep.subr.bf16.mxu0 0
  %743 = vmatpush1.bf16.msra.mxu0 %v526
  %744 = vmatprep.subr.bf16.mxu0 0
  %745 = vmatpush1.bf16.msra.mxu0 %v527
  %746 = vmatprep.subr.bf16.mxu0 0
  %747 = vmatpush1.bf16.msra.mxu0 %v528
  %748 = vmatprep.mubr.bf16.mxu0 %v200
  %749 = vmatmul.mubr.bf16.gmra.mrb[0].mxu0 %v199
  %v750 = vpop.f32.mrb[0].mxu0
  %v751 = vadd.f32 %v710, %v750
  %v752 = vpop.f32.mrb[0].mxu0
  %v753 = vpop.f32.mrb[0].mxu0
  %v754 = vadd.f32 %v713, %v753
  %v755 = vpop.f32.mrb[0].mxu0
  %756 = vdwg.mxu0
  %v757 = vmax.f32 %v751, 0.0
  %v758 = vmax.f32 %v754, 0.0
  %v759 = vpack.c.bf16 %v758, %v757
  %v760 = vld [vmem:[%s4] sm:$0xf]
  %v761 = vld [vmem:[%s4 + $0x4] sm:$0xf]
  %v762 = vld [vmem:[%s4 + $0x8] sm:$0xf]
  %v763 = vld [vmem:[%s4 + $0xc] sm:$0xf]
  %v764 = vld [vmem:[%s4 + $0x10] sm:$0xf]
  %v765 = vld [vmem:[%s4 + $0x14] sm:$0xf]
  %v766 = vld [vmem:[%s4 + $0x18] sm:$0xf]
  %v767 = vld [vmem:[%s4 + $0x1c] sm:$0xf]
  %v768 = vld [vmem:[%s4 + $0x20] sm:$0xf]
  %v769 = vld [vmem:[%s4 + $0x24] sm:$0xf]
  %v770 = vld [vmem:[%s4 + $0x28] sm:$0xf]
  %v771 = vld [vmem:[%s4 + $0x2c] sm:$0xf]
  %v772 = vld [vmem:[%s4 + $0x30] sm:$0xf]
  %v773 = vld [vmem:[%s4 + $0x34] sm:$0xf]
  %v774 = vld [vmem:[%s4 + $0x38] sm:$0xf]
  %v775 = vld [vmem:[%s4 + $0x3c] sm:$0xf]
  %v776 = vld [vmem:[%s5] sm:$0x1]
  %v778 = vlaneseq
  %v779 = vshrl.u32 %v778, 7
  %v780 = vsub.s32 0, %v779
  %v781 = vrot.slane %v776, %v780
  %v799 = vunpack.c.l.b16 %v760
  %v800 = vunpack.c.l.b16 %v761
  %v801 = vunpack.c.l.b16 %v762
  %v802 = vunpack.c.l.b16 %v763
  %v803 = vunpack.c.l.b16 %v764
  %v804 = vunpack.c.l.b16 %v765
  %v805 = vunpack.c.l.b16 %v766
  %v806 = vunpack.c.l.b16 %v767
  %v807 = vunpack.c.l.b16 %v768
  %v808 = vunpack.c.l.b16 %v769
  %v809 = vunpack.c.l.b16 %v770
  %v810 = vunpack.c.l.b16 %v771
  %v811 = vunpack.c.l.b16 %v772
  %v812 = vunpack.c.l.b16 %v773
  %v813 = vunpack.c.l.b16 %v774
  %v814 = vunpack.c.l.b16 %v775
  %v815 = vpack.c.b16 %v800, %v799
  %v816 = vpack.c.b16 %v802, %v801
  %v817 = vpack.c.b16 %v804, %v803
  %v818 = vpack.c.b16 %v806, %v805
  %v819 = vpack.c.b16 %v808, %v807
  %v820 = vpack.c.b16 %v810, %v809
  %v821 = vpack.c.b16 %v812, %v811
  %v822 = vpack.c.b16 %v814, %v813
  %831 = vmatprep.subr.bf16.mxu0 0
  %832 = vmatpush1.bf16.msra.mxu0 %v815
  %833 = vmatprep.subr.bf16.mxu0 0
  %834 = vmatpush1.bf16.msra.mxu0 %v816
  %835 = vmatprep.subr.bf16.mxu0 0
  %836 = vmatpush1.bf16.msra.mxu0 %v817
  %837 = vmatprep.subr.bf16.mxu0 0
  %838 = vmatpush1.bf16.msra.mxu0 %v818
  %839 = vmatprep.subr.bf16.mxu0 0
  %840 = vmatpush1.bf16.msra.mxu0 %v819
  %841 = vmatprep.subr.bf16.mxu0 0
  %842 = vmatpush1.bf16.msra.mxu0 %v820
  %843 = vmatprep.subr.bf16.mxu0 0
  %844 = vmatpush1.bf16.msra.mxu0 %v821
  %845 = vmatprep.subr.bf16.mxu0 0
  %846 = vmatpush1.bf16.msra.mxu0 %v822
  %847 = vmatprep.subr.bf16.mxu0 0
  %848 = vmatpush1.bf16.msra.mxu0 0
  %849 = vmatprep.subr.bf16.mxu0 0
  %850 = vmatpush1.bf16.msra.mxu0 0
  %851 = vmatprep.subr.bf16.mxu0 0
  %852 = vmatpush1.bf16.msra.mxu0 0
  %853 = vmatprep.subr.bf16.mxu0 0
  %854 = vmatpush1.bf16.msra.mxu0 0
  %855 = vmatprep.subr.bf16.mxu0 0
  %856 = vmatpush1.bf16.msra.mxu0 0
  %857 = vmatprep.subr.bf16.mxu0 0
  %858 = vmatpush1.bf16.msra.mxu0 0
  %859 = vmatprep.subr.bf16.mxu0 0
  %860 = vmatpush1.bf16.msra.mxu0 0
  %861 = vmatprep.subr.bf16.mxu0 0
  %862 = vmatpush1.bf16.msra.mxu0 0
  %863 = vmatprep.mubr.bf16.mxu0 0
  %864 = vmatmul.mubr.bf16.gmra.mrb[0].mxu0 %v759
  %v865 = vpop.f32.mrb[0].mxu0
  %v866 = vadd.f32 %v781, %v865
  %v867 = vpop.f32.mrb[0].mxu0
  %v868 = vpop.f32.mrb[0].mxu0
  %v869 = vadd.f32 %v781, %v868
  %v870 = vpop.f32.mrb[0].mxu0
  %871 = vdwg.mxu0
  %872 = vst [vmem:[%s6] sm:$0xff] %v866
  %873 = vst [vmem:[%s6 + $0x8] sm:$0xff] %v869
  %v874 = vld [vmem:[%s1] sm:$0xff]
  %v875 = vld [vmem:[%s1 + $0x8] sm:$0xff]
  %v876 = vld [vmem:[%s1 + $0x10] sm:$0xff]
  %v877 = vld [vmem:[%s1 + $0x18] sm:$0xff]
  %v878 = vld [vmem:[%s1 + $0x20] sm:$0xff]
  %v879 = vld [vmem:[%s1 + $0x28] sm:$0xff]
  %v880 = vld [vmem:[%s1 + $0x30] sm:$0xff]
  %v881 = vld [vmem:[%s1 + $0x38] sm:$0xff]
  %v882 = vld [vmem:[%s2] sm:$0xf]
  %v883 = vld [vmem:[%s2 + $0x4] sm:$0xf]
  %v884 = vld [vmem:[%s2 + $0x8] sm:$0xf]
  %v885 = vld [vmem:[%s2 + $0xc] sm:$0xf]
  %v886 = vld [vmem:[%s2 + $0x10] sm:$0xf]
  %v887 = vld [vmem:[%s2 + $0x14] sm:$0xf]
  %v888 = vld [vmem:[%s2 + $0x18] sm:$0xf]
  %v889 = vld [vmem:[%s2 + $0x1c] sm:$0xf]
  %v890 = vld [vmem:[%s2 + $0x20] sm:$0xf]
  %v891 = vld [vmem:[%s2 + $0x24] sm:$0xf]
  %v892 = vld [vmem:[%s2 + $0x28] sm:$0xf]
  %v893 = vld [vmem:[%s2 + $0x2c] sm:$0xf]
  %v894 = vld [vmem:[%s2 + $0x30] sm:$0xf]
  %v895 = vld [vmem:[%s2 + $0x34] sm:$0xf]
  %v896 = vld [vmem:[%s2 + $0x38] sm:$0xf]
  %v897 = vld [vmem:[%s2 + $0x3c] sm:$0xf]
  %v898 = vld [vmem:[%s2 + $0x40] sm:$0xf]
  %v899 = vld [vmem:[%s2 + $0x44] sm:$0xf]
  %v900 = vld [vmem:[%s2 + $0x48] sm:$0xf]
  %v901 = vld [vmem:[%s2 + $0x4c] sm:$0xf]
  %v902 = vld [vmem:[%s2 + $0x50] sm:$0xf]
  %v903 = vld [vmem:[%s2 + $0x54] sm:$0xf]
  %v904 = vld [vmem:[%s2 + $0x58] sm:$0xf]
  %v905 = vld [vmem:[%s2 + $0x5c] sm:$0xf]
  %v906 = vld [vmem:[%s2 + $0x60] sm:$0xf]
  %v907 = vld [vmem:[%s2 + $0x64] sm:$0xf]
  %v908 = vld [vmem:[%s2 + $0x68] sm:$0xf]
  %v909 = vld [vmem:[%s2 + $0x6c] sm:$0xf]
  %v910 = vld [vmem:[%s2 + $0x70] sm:$0xf]
  %v911 = vld [vmem:[%s2 + $0x74] sm:$0xf]
  %v912 = vld [vmem:[%s2 + $0x78] sm:$0xf]
  %v913 = vld [vmem:[%s2 + $0x7c] sm:$0xf]
  %v914 = vld [vmem:[%s2 + $0x80] sm:$0xf]
  %v915 = vld [vmem:[%s2 + $0x84] sm:$0xf]
  %v916 = vld [vmem:[%s2 + $0x88] sm:$0xf]
  %v917 = vld [vmem:[%s2 + $0x8c] sm:$0xf]
  %v918 = vld [vmem:[%s2 + $0x90] sm:$0xf]
  %v919 = vld [vmem:[%s2 + $0x94] sm:$0xf]
  %v920 = vld [vmem:[%s2 + $0x98] sm:$0xf]
  %v921 = vld [vmem:[%s2 + $0x9c] sm:$0xf]
  %v922 = vld [vmem:[%s2 + $0xa0] sm:$0xf]
  %v923 = vld [vmem:[%s2 + $0xa4] sm:$0xf]
  %v924 = vld [vmem:[%s2 + $0xa8] sm:$0xf]
  %v925 = vld [vmem:[%s2 + $0xac] sm:$0xf]
  %v926 = vld [vmem:[%s2 + $0xb0] sm:$0xf]
  %v927 = vld [vmem:[%s2 + $0xb4] sm:$0xf]
  %v928 = vld [vmem:[%s2 + $0xb8] sm:$0xf]
  %v929 = vld [vmem:[%s2 + $0xbc] sm:$0xf]
  %v930 = vld [vmem:[%s2 + $0xc0] sm:$0xf]
  %v931 = vld [vmem:[%s2 + $0xc4] sm:$0xf]
  %v932 = vld [vmem:[%s2 + $0xc8] sm:$0xf]
  %v933 = vld [vmem:[%s2 + $0xcc] sm:$0xf]
  %v934 = vld [vmem:[%s2 + $0xd0] sm:$0xf]
  %v935 = vld [vmem:[%s2 + $0xd4] sm:$0xf]
  %v936 = vld [vmem:[%s2 + $0xd8] sm:$0xf]
  %v937 = vld [vmem:[%s2 + $0xdc] sm:$0xf]
  %v938 = vld [vmem:[%s2 + $0xe0] sm:$0xf]
  %v939 = vld [vmem:[%s2 + $0xe4] sm:$0xf]
  %v940 = vld [vmem:[%s2 + $0xe8] sm:$0xf]
  %v941 = vld [vmem:[%s2 + $0xec] sm:$0xf]
  %v942 = vld [vmem:[%s2 + $0xf0] sm:$0xf]
  %v943 = vld [vmem:[%s2 + $0xf4] sm:$0xf]
  %v944 = vld [vmem:[%s2 + $0xf8] sm:$0xf]
  %v945 = vld [vmem:[%s2 + $0xfc] sm:$0xf]
  %v946 = vld [vmem:[%s2 + $0x100] sm:$0xf]
  %v947 = vld [vmem:[%s2 + $0x104] sm:$0xf]
  %v948 = vld [vmem:[%s2 + $0x108] sm:$0xf]
  %v949 = vld [vmem:[%s2 + $0x10c] sm:$0xf]
  %v950 = vld [vmem:[%s2 + $0x110] sm:$0xf]
  %v951 = vld [vmem:[%s2 + $0x114] sm:$0xf]
  %v952 = vld [vmem:[%s2 + $0x118] sm:$0xf]
  %v953 = vld [vmem:[%s2 + $0x11c] sm:$0xf]
  %v954 = vld [vmem:[%s2 + $0x120] sm:$0xf]
  %v955 = vld [vmem:[%s2 + $0x124] sm:$0xf]
  %v956 = vld [vmem:[%s2 + $0x128] sm:$0xf]
  %v957 = vld [vmem:[%s2 + $0x12c] sm:$0xf]
  %v958 = vld [vmem:[%s2 + $0x130] sm:$0xf]
  %v959 = vld [vmem:[%s2 + $0x134] sm:$0xf]
  %v960 = vld [vmem:[%s2 + $0x138] sm:$0xf]
  %v961 = vld [vmem:[%s2 + $0x13c] sm:$0xf]
  %v962 = vld [vmem:[%s2 + $0x140] sm:$0xf]
  %v963 = vld [vmem:[%s2 + $0x144] sm:$0xf]
  %v964 = vld [vmem:[%s2 + $0x148] sm:$0xf]
  %v965 = vld [vmem:[%s2 + $0x14c] sm:$0xf]
  %v966 = vld [vmem:[%s2 + $0x150] sm:$0xf]
  %v967 = vld [vmem:[%s2 + $0x154] sm:$0xf]
  %v968 = vld [vmem:[%s2 + $0x158] sm:$0xf]
  %v969 = vld [vmem:[%s2 + $0x15c] sm:$0xf]
  %v970 = vld [vmem:[%s2 + $0x160] sm:$0xf]
  %v971 = vld [vmem:[%s2 + $0x164] sm:$0xf]
  %v972 = vld [vmem:[%s2 + $0x168] sm:$0xf]
  %v973 = vld [vmem:[%s2 + $0x16c] sm:$0xf]
  %v974 = vld [vmem:[%s2 + $0x170] sm:$0xf]
  %v975 = vld [vmem:[%s2 + $0x174] sm:$0xf]
  %v976 = vld [vmem:[%s2 + $0x178] sm:$0xf]
  %v977 = vld [vmem:[%s2 + $0x17c] sm:$0xf]
  %v978 = vld [vmem:[%s2 + $0x180] sm:$0xf]
  %v979 = vld [vmem:[%s2 + $0x184] sm:$0xf]
  %v980 = vld [vmem:[%s2 + $0x188] sm:$0xf]
  %v981 = vld [vmem:[%s2 + $0x18c] sm:$0xf]
  %v982 = vld [vmem:[%s2 + $0x190] sm:$0xf]
  %v983 = vld [vmem:[%s2 + $0x194] sm:$0xf]
  %v984 = vld [vmem:[%s2 + $0x198] sm:$0xf]
  %v985 = vld [vmem:[%s2 + $0x19c] sm:$0xf]
  %v986 = vld [vmem:[%s2 + $0x1a0] sm:$0xf]
  %v987 = vld [vmem:[%s2 + $0x1a4] sm:$0xf]
  %v988 = vld [vmem:[%s2 + $0x1a8] sm:$0xf]
  %v989 = vld [vmem:[%s2 + $0x1ac] sm:$0xf]
  %v990 = vld [vmem:[%s2 + $0x1b0] sm:$0xf]
  %v991 = vld [vmem:[%s2 + $0x1b4] sm:$0xf]
  %v992 = vld [vmem:[%s2 + $0x1b8] sm:$0xf]
  %v993 = vld [vmem:[%s2 + $0x1bc] sm:$0xf]
  %v994 = vld [vmem:[%s2 + $0x1c0] sm:$0xf]
  %v995 = vld [vmem:[%s2 + $0x1c4] sm:$0xf]
  %v996 = vld [vmem:[%s2 + $0x1c8] sm:$0xf]
  %v997 = vld [vmem:[%s2 + $0x1cc] sm:$0xf]
  %v998 = vld [vmem:[%s2 + $0x1d0] sm:$0xf]
  %v999 = vld [vmem:[%s2 + $0x1d4] sm:$0xf]
  %v1000 = vld [vmem:[%s2 + $0x1d8] sm:$0xf]
  %v1001 = vld [vmem:[%s2 + $0x1dc] sm:$0xf]
  %v1002 = vld [vmem:[%s2 + $0x1e0] sm:$0xf]
  %v1003 = vld [vmem:[%s2 + $0x1e4] sm:$0xf]
  %v1004 = vld [vmem:[%s2 + $0x1e8] sm:$0xf]
  %v1005 = vld [vmem:[%s2 + $0x1ec] sm:$0xf]
  %v1006 = vld [vmem:[%s2 + $0x1f0] sm:$0xf]
  %v1007 = vld [vmem:[%s2 + $0x1f4] sm:$0xf]
  %v1008 = vld [vmem:[%s2 + $0x1f8] sm:$0xf]
  %v1009 = vld [vmem:[%s2 + $0x1fc] sm:$0xf]
  %v1010 = vld [vmem:[%s3] sm:$0x1]
  %v1012 = vlaneseq
  %v1013 = vshrl.u32 %v1012, 7
  %v1014 = vsub.s32 0, %v1013
  %v1015 = vrot.slane %v1010, %v1014
  %v1025 = vunpack.c.l.b16 %v874
  %v1026 = vunpack.c.h.b16 %v874
  %v1027 = vunpack.c.l.b16 %v875
  %v1028 = vunpack.c.h.b16 %v875
  %v1029 = vunpack.c.l.b16 %v876
  %v1030 = vunpack.c.h.b16 %v876
  %v1031 = vunpack.c.l.b16 %v877
  %v1032 = vunpack.c.h.b16 %v877
  %v1033 = vunpack.c.l.b16 %v878
  %v1034 = vunpack.c.h.b16 %v878
  %v1035 = vunpack.c.l.b16 %v879
  %v1036 = vunpack.c.h.b16 %v879
  %v1037 = vunpack.c.l.b16 %v880
  %v1038 = vunpack.c.h.b16 %v880
  %v1039 = vunpack.c.l.b16 %v881
  %v1040 = vunpack.c.h.b16 %v881
  %v1041 = vpack.c.b16 %v1033, %v1025
  %v1042 = vpack.c.b16 %v1034, %v1026
  %v1043 = vpack.c.b16 %v1035, %v1027
  %v1044 = vpack.c.b16 %v1036, %v1028
  %v1045 = vpack.c.b16 %v1037, %v1029
  %v1046 = vpack.c.b16 %v1038, %v1030
  %v1047 = vpack.c.b16 %v1039, %v1031
  %v1048 = vpack.c.b16 %v1040, %v1032
  %v1185 = vunpack.c.l.b16 %v882
  %v1186 = vunpack.c.l.b16 %v883
  %v1187 = vunpack.c.l.b16 %v884
  %v1188 = vunpack.c.l.b16 %v885
  %v1189 = vunpack.c.l.b16 %v886
  %v1190 = vunpack.c.l.b16 %v887
  %v1191 = vunpack.c.l.b16 %v888
  %v1192 = vunpack.c.l.b16 %v889
  %v1193 = vunpack.c.l.b16 %v890
  %v1194 = vunpack.c.l.b16 %v891
  %v1195 = vunpack.c.l.b16 %v892
  %v1196 = vunpack.c.l.b16 %v893
  %v1197 = vunpack.c.l.b16 %v894
  %v1198 = vunpack.c.l.b16 %v895
  %v1199 = vunpack.c.l.b16 %v896
  %v1200 = vunpack.c.l.b16 %v897
  %v1201 = vunpack.c.l.b16 %v898
  %v1202 = vunpack.c.l.b16 %v899
  %v1203 = vunpack.c.l.b16 %v900
  %v1204 = vunpack.c.l.b16 %v901
  %v1205 = vunpack.c.l.b16 %v902
  %v1206 = vunpack.c.l.b16 %v903
  %v1207 = vunpack.c.l.b16 %v904
  %v1208 = vunpack.c.l.b16 %v905
  %v1209 = vunpack.c.l.b16 %v906
  %v1210 = vunpack.c.l.b16 %v907
  %v1211 = vunpack.c.l.b16 %v908
  %v1212 = vunpack.c.l.b16 %v909
  %v1213 = vunpack.c.l.b16 %v910
  %v1214 = vunpack.c.l.b16 %v911
  %v1215 = vunpack.c.l.b16 %v912
  %v1216 = vunpack.c.l.b16 %v913
  %v1217 = vunpack.c.l.b16 %v914
  %v1218 = vunpack.c.l.b16 %v915
  %v1219 = vunpack.c.l.b16 %v916
  %v1220 = vunpack.c.l.b16 %v917
  %v1221 = vunpack.c.l.b16 %v918
  %v1222 = vunpack.c.l.b16 %v919
  %v1223 = vunpack.c.l.b16 %v920
  %v1224 = vunpack.c.l.b16 %v921
  %v1225 = vunpack.c.l.b16 %v922
  %v1226 = vunpack.c.l.b16 %v923
  %v1227 = vunpack.c.l.b16 %v924
  %v1228 = vunpack.c.l.b16 %v925
  %v1229 = vunpack.c.l.b16 %v926
  %v1230 = vunpack.c.l.b16 %v927
  %v1231 = vunpack.c.l.b16 %v928
  %v1232 = vunpack.c.l.b16 %v929
  %v1233 = vunpack.c.l.b16 %v930
  %v1234 = vunpack.c.l.b16 %v931
  %v1235 = vunpack.c.l.b16 %v932
  %v1236 = vunpack.c.l.b16 %v933
  %v1237 = vunpack.c.l.b16 %v934
  %v1238 = vunpack.c.l.b16 %v935
  %v1239 = vunpack.c.l.b16 %v936
  %v1240 = vunpack.c.l.b16 %v937
  %v1241 = vunpack.c.l.b16 %v938
  %v1242 = vunpack.c.l.b16 %v939
  %v1243 = vunpack.c.l.b16 %v940
  %v1244 = vunpack.c.l.b16 %v941
  %v1245 = vunpack.c.l.b16 %v942
  %v1246 = vunpack.c.l.b16 %v943
  %v1247 = vunpack.c.l.b16 %v944
  %v1248 = vunpack.c.l.b16 %v945
  %v1249 = vunpack.c.l.b16 %v946
  %v1250 = vunpack.c.l.b16 %v947
  %v1251 = vunpack.c.l.b16 %v948
  %v1252 = vunpack.c.l.b16 %v949
  %v1253 = vunpack.c.l.b16 %v950
  %v1254 = vunpack.c.l.b16 %v951
  %v1255 = vunpack.c.l.b16 %v952
  %v1256 = vunpack.c.l.b16 %v953
  %v1257 = vunpack.c.l.b16 %v954
  %v1258 = vunpack.c.l.b16 %v955
  %v1259 = vunpack.c.l.b16 %v956
  %v1260 = vunpack.c.l.b16 %v957
  %v1261 = vunpack.c.l.b16 %v958
  %v1262 = vunpack.c.l.b16 %v959
  %v1263 = vunpack.c.l.b16 %v960
  %v1264 = vunpack.c.l.b16 %v961
  %v1265 = vunpack.c.l.b16 %v962
  %v1266 = vunpack.c.l.b16 %v963
  %v1267 = vunpack.c.l.b16 %v964
  %v1268 = vunpack.c.l.b16 %v965
  %v1269 = vunpack.c.l.b16 %v966
  %v1270 = vunpack.c.l.b16 %v967
  %v1271 = vunpack.c.l.b16 %v968
  %v1272 = vunpack.c.l.b16 %v969
  %v1273 = vunpack.c.l.b16 %v970
  %v1274 = vunpack.c.l.b16 %v971
  %v1275 = vunpack.c.l.b16 %v972
  %v1276 = vunpack.c.l.b16 %v973
  %v1277 = vunpack.c.l.b16 %v974
  %v1278 = vunpack.c.l.b16 %v975
  %v1279 = vunpack.c.l.b16 %v976
  %v1280 = vunpack.c.l.b16 %v977
  %v1281 = vunpack.c.l.b16 %v978
  %v1282 = vunpack.c.l.b16 %v979
  %v1283 = vunpack.c.l.b16 %v980
  %v1284 = vunpack.c.l.b16 %v981
  %v1285 = vunpack.c.l.b16 %v982
  %v1286 = vunpack.c.l.b16 %v983
  %v1287 = vunpack.c.l.b16 %v984
  %v1288 = vunpack.c.l.b16 %v985
  %v1289 = vunpack.c.l.b16 %v986
  %v1290 = vunpack.c.l.b16 %v987
  %v1291 = vunpack.c.l.b16 %v988
  %v1292 = vunpack.c.l.b16 %v989
  %v1293 = vunpack.c.l.b16 %v990
  %v1294 = vunpack.c.l.b16 %v991
  %v1295 = vunpack.c.l.b16 %v992
  %v1296 = vunpack.c.l.b16 %v993
  %v1297 = vunpack.c.l.b16 %v994
  %v1298 = vunpack.c.l.b16 %v995
  %v1299 = vunpack.c.l.b16 %v996
  %v1300 = vunpack.c.l.b16 %v997
  %v1301 = vunpack.c.l.b16 %v998
  %v1302 = vunpack.c.l.b16 %v999
  %v1303 = vunpack.c.l.b16 %v1000
  %v1304 = vunpack.c.l.b16 %v1001
  %v1305 = vunpack.c.l.b16 %v1002
  %v1306 = vunpack.c.l.b16 %v1003
  %v1307 = vunpack.c.l.b16 %v1004
  %v1308 = vunpack.c.l.b16 %v1005
  %v1309 = vunpack.c.l.b16 %v1006
  %v1310 = vunpack.c.l.b16 %v1007
  %v1311 = vunpack.c.l.b16 %v1008
  %v1312 = vunpack.c.l.b16 %v1009
  %v1313 = vpack.c.b16 %v1186, %v1185
  %v1314 = vpack.c.b16 %v1188, %v1187
  %v1315 = vpack.c.b16 %v1190, %v1189
  %v1316 = vpack.c.b16 %v1192, %v1191
  %v1317 = vpack.c.b16 %v1194, %v1193
  %v1318 = vpack.c.b16 %v1196, %v1195
  %v1319 = vpack.c.b16 %v1198, %v1197
  %v1320 = vpack.c.b16 %v1200, %v1199
  %v1321 = vpack.c.b16 %v1202, %v1201
  %v1322 = vpack.c.b16 %v1204, %v1203
  %v1323 = vpack.c.b16 %v1206, %v1205
  %v1324 = vpack.c.b16 %v1208, %v1207
  %v1325 = vpack.c.b16 %v1210, %v1209
  %v1326 = vpack.c.b16 %v1212, %v1211
  %v1327 = vpack.c.b16 %v1214, %v1213
  %v1328 = vpack.c.b16 %v1216, %v1215
  %v1329 = vpack.c.b16 %v1218, %v1217
  %v1330 = vpack.c.b16 %v1220, %v1219
  %v1331 = vpack.c.b16 %v1222, %v1221
  %v1332 = vpack.c.b16 %v1224, %v1223
  %v1333 = vpack.c.b16 %v1226, %v1225
  %v1334 = vpack.c.b16 %v1228, %v1227
  %v1335 = vpack.c.b16 %v1230, %v1229
  %v1336 = vpack.c.b16 %v1232, %v1231
  %v1337 = vpack.c.b16 %v1234, %v1233
  %v1338 = vpack.c.b16 %v1236, %v1235
  %v1339 = vpack.c.b16 %v1238, %v1237
  %v1340 = vpack.c.b16 %v1240, %v1239
  %v1341 = vpack.c.b16 %v1242, %v1241
  %v1342 = vpack.c.b16 %v1244, %v1243
  %v1343 = vpack.c.b16 %v1246, %v1245
  %v1344 = vpack.c.b16 %v1248, %v1247
  %v1345 = vpack.c.b16 %v1250, %v1249
  %v1346 = vpack.c.b16 %v1252, %v1251
  %v1347 = vpack.c.b16 %v1254, %v1253
  %v1348 = vpack.c.b16 %v1256, %v1255
  %v1349 = vpack.c.b16 %v1258, %v1257
  %v1350 = vpack.c.b16 %v1260, %v1259
  %v1351 = vpack.c.b16 %v1262, %v1261
  %v1352 = vpack.c.b16 %v1264, %v1263
  %v1353 = vpack.c.b16 %v1266, %v1265
  %v1354 = vpack.c.b16 %v1268, %v1267
  %v1355 = vpack.c.b16 %v1270, %v1269
  %v1356 = vpack.c.b16 %v1272, %v1271
  %v1357 = vpack.c.b16 %v1274, %v1273
  %v1358 = vpack.c.b16 %v1276, %v1275
  %v1359 = vpack.c.b16 %v1278, %v1277
  %v1360 = vpack.c.b16 %v1280, %v1279
  %v1361 = vpack.c.b16 %v1282, %v1281
  %v1362 = vpack.c.b16 %v1284, %v1283
  %v1363 = vpack.c.b16 %v1286, %v1285
  %v1364 = vpack.c.b16 %v1288, %v1287
  %v1365 = vpack.c.b16 %v1290, %v1289
  %v1366 = vpack.c.b16 %v1292, %v1291
  %v1367 = vpack.c.b16 %v1294, %v1293
  %v1368 = vpack.c.b16 %v1296, %v1295
  %v1369 = vpack.c.b16 %v1298, %v1297
  %v1370 = vpack.c.b16 %v1300, %v1299
  %v1371 = vpack.c.b16 %v1302, %v1301
  %v1372 = vpack.c.b16 %v1304, %v1303
  %v1373 = vpack.c.b16 %v1306, %v1305
  %v1374 = vpack.c.b16 %v1308, %v1307
  %v1375 = vpack.c.b16 %v1310, %v1309
  %v1376 = vpack.c.b16 %v1312, %v1311
  %1441 = vmatprep.subr.bf16.mxu0 0
  %1442 = vmatpush1.bf16.msra.mxu0 %v1313
  %1443 = vmatprep.subr.bf16.mxu0 0
  %1444 = vmatpush1.bf16.msra.mxu0 %v1314
  %1445 = vmatprep.subr.bf16.mxu0 0
  %1446 = vmatpush1.bf16.msra.mxu0 %v1315
  %1447 = vmatprep.subr.bf16.mxu0 0
  %1448 = vmatpush1.bf16.msra.mxu0 %v1316
  %1449 = vmatprep.subr.bf16.mxu0 0
  %1450 = vmatpush1.bf16.msra.mxu0 %v1317
  %1451 = vmatprep.subr.bf16.mxu0 0
  %1452 = vmatpush1.bf16.msra.mxu0 %v1318
  %1453 = vmatprep.subr.bf16.mxu0 0
  %1454 = vmatpush1.bf16.msra.mxu0 %v1319
  %1455 = vmatprep.subr.bf16.mxu0 0
  %1456 = vmatpush1.bf16.msra.mxu0 %v1320
  %1457 = vmatprep.subr.bf16.mxu0 0
  %1458 = vmatpush1.bf16.msra.mxu0 %v1321
  %1459 = vmatprep.subr.bf16.mxu0 0
  %1460 = vmatpush1.bf16.msra.mxu0 %v1322
  %1461 = vmatprep.subr.bf16.mxu0 0
  %1462 = vmatpush1.bf16.msra.mxu0 %v1323
  %1463 = vmatprep.subr.bf16.mxu0 0
  %1464 = vmatpush1.bf16.msra.mxu0 %v1324
  %1465 = vmatprep.subr.bf16.mxu0 0
  %1466 = vmatpush1.bf16.msra.mxu0 %v1325
  %1467 = vmatprep.subr.bf16.mxu0 0
  %1468 = vmatpush1.bf16.msra.mxu0 %v1326
  %1469 = vmatprep.subr.bf16.mxu0 0
  %1470 = vmatpush1.bf16.msra.mxu0 %v1327
  %1471 = vmatprep.subr.bf16.mxu0 0
  %1472 = vmatpush1.bf16.msra.mxu0 %v1328
  %1473 = vmatprep.mubr.bf16.mxu0 %v1042
  %1474 = vmatmul.mubr.bf16.gmra.mrb[0].mxu0 %v1041
  %v1475 = vpop.f32.mrb[0].mxu0
  %v1476 = vadd.f32 %v1015, %v1475
  %v1477 = vpop.f32.mrb[0].mxu0
  %v1478 = vpop.f32.mrb[0].mxu0
  %v1479 = vadd.f32 %v1015, %v1478
  %v1480 = vpop.f32.mrb[0].mxu0
  %1481 = vdwg.mxu0
  %1482 = vmatprep.subr.bf16.mxu0 0
  %1483 = vmatpush1.bf16.msra.mxu0 %v1329
  %1484 = vmatprep.subr.bf16.mxu0 0
  %1485 = vmatpush1.bf16.msra.mxu0 %v1330
  %1486 = vmatprep.subr.bf16.mxu0 0
  %1487 = vmatpush1.bf16.msra.mxu0 %v1331
  %1488 = vmatprep.subr.bf16.mxu0 0
  %1489 = vmatpush1.bf16.msra.mxu0 %v1332
  %1490 = vmatprep.subr.bf16.mxu0 0
  %1491 = vmatpush1.bf16.msra.mxu0 %v1333
  %1492 = vmatprep.subr.bf16.mxu0 0
  %1493 = vmatpush1.bf16.msra.mxu0 %v1334
  %1494 = vmatprep.subr.bf16.mxu0 0
  %1495 = vmatpush1.bf16.msra.mxu0 %v1335
  %1496 = vmatprep.subr.bf16.mxu0 0
  %1497 = vmatpush1.bf16.msra.mxu0 %v1336
  %1498 = vmatprep.subr.bf16.mxu0 0
  %1499 = vmatpush1.bf16.msra.mxu0 %v1337
  %1500 = vmatprep.subr.bf16.mxu0 0
  %1501 = vmatpush1.bf16.msra.mxu0 %v1338
  %1502 = vmatprep.subr.bf16.mxu0 0
  %1503 = vmatpush1.bf16.msra.mxu0 %v1339
  %1504 = vmatprep.subr.bf16.mxu0 0
  %1505 = vmatpush1.bf16.msra.mxu0 %v1340
  %1506 = vmatprep.subr.bf16.mxu0 0
  %1507 = vmatpush1.bf16.msra.mxu0 %v1341
  %1508 = vmatprep.subr.bf16.mxu0 0
  %1509 = vmatpush1.bf16.msra.mxu0 %v1342
  %1510 = vmatprep.subr.bf16.mxu0 0
  %1511 = vmatpush1.bf16.msra.mxu0 %v1343
  %1512 = vmatprep.subr.bf16.mxu0 0
  %1513 = vmatpush1.bf16.msra.mxu0 %v1344
  %1514 = vmatprep.mubr.bf16.mxu0 %v1044
  %1515 = vmatmul.mubr.bf16.gmra.mrb[0].mxu0 %v1043
  %v1516 = vpop.f32.mrb[0].mxu0
  %v1517 = vadd.f32 %v1476, %v1516
  %v1518 = vpop.f32.mrb[0].mxu0
  %v1519 = vpop.f32.mrb[0].mxu0
  %v1520 = vadd.f32 %v1479, %v1519
  %v1521 = vpop.f32.mrb[0].mxu0
  %1522 = vdwg.mxu0
  %1523 = vmatprep.subr.bf16.mxu0 0
  %1524 = vmatpush1.bf16.msra.mxu0 %v1345
  %1525 = vmatprep.subr.bf16.mxu0 0
  %1526 = vmatpush1.bf16.msra.mxu0 %v1346
  %1527 = vmatprep.subr.bf16.mxu0 0
  %1528 = vmatpush1.bf16.msra.mxu0 %v1347
  %1529 = vmatprep.subr.bf16.mxu0 0
  %1530 = vmatpush1.bf16.msra.mxu0 %v1348
  %1531 = vmatprep.subr.bf16.mxu0 0
  %1532 = vmatpush1.bf16.msra.mxu0 %v1349
  %1533 = vmatprep.subr.bf16.mxu0 0
  %1534 = vmatpush1.bf16.msra.mxu0 %v1350
  %1535 = vmatprep.subr.bf16.mxu0 0
  %1536 = vmatpush1.bf16.msra.mxu0 %v1351
  %1537 = vmatprep.subr.bf16.mxu0 0
  %1538 = vmatpush1.bf16.msra.mxu0 %v1352
  %1539 = vmatprep.subr.bf16.mxu0 0
  %1540 = vmatpush1.bf16.msra.mxu0 %v1353
  %1541 = vmatprep.subr.bf16.mxu0 0
  %1542 = vmatpush1.bf16.msra.mxu0 %v1354
  %1543 = vmatprep.subr.bf16.mxu0 0
  %1544 = vmatpush1.bf16.msra.mxu0 %v1355
  %1545 = vmatprep.subr.bf16.mxu0 0
  %1546 = vmatpush1.bf16.msra.mxu0 %v1356
  %1547 = vmatprep.subr.bf16.mxu0 0
  %1548 = vmatpush1.bf16.msra.mxu0 %v1357
  %1549 = vmatprep.subr.bf16.mxu0 0
  %1550 = vmatpush1.bf16.msra.mxu0 %v1358
  %1551 = vmatprep.subr.bf16.mxu0 0
  %1552 = vmatpush1.bf16.msra.mxu0 %v1359
  %1553 = vmatprep.subr.bf16.mxu0 0
  %1554 = vmatpush1.bf16.msra.mxu0 %v1360
  %1555 = vmatprep.mubr.bf16.mxu0 %v1046
  %1556 = vmatmul.mubr.bf16.gmra.mrb[0].mxu0 %v1045
  %v1557 = vpop.f32.mrb[0].mxu0
  %v1558 = vadd.f32 %v1517, %v1557
  %v1559 = vpop.f32.mrb[0].mxu0
  %v1560 = vpop.f32.mrb[0].mxu0
  %v1561 = vadd.f32 %v1520, %v1560
  %v1562 = vpop.f32.mrb[0].mxu0
  %1563 = vdwg.mxu0
  %1564 = vmatprep.subr.bf16.mxu0 0
  %1565 = vmatpush1.bf16.msra.mxu0 %v1361
  %1566 = vmatprep.subr.bf16.mxu0 0
  %1567 = vmatpush1.bf16.msra.mxu0 %v1362
  %1568 = vmatprep.subr.bf16.mxu0 0
  %1569 = vmatpush1.bf16.msra.mxu0 %v1363
  %1570 = vmatprep.subr.bf16.mxu0 0
  %1571 = vmatpush1.bf16.msra.mxu0 %v1364
  %1572 = vmatprep.subr.bf16.mxu0 0
  %1573 = vmatpush1.bf16.msra.mxu0 %v1365
  %1574 = vmatprep.subr.bf16.mxu0 0
  %1575 = vmatpush1.bf16.msra.mxu0 %v1366
  %1576 = vmatprep.subr.bf16.mxu0 0
  %1577 = vmatpush1.bf16.msra.mxu0 %v1367
  %1578 = vmatprep.subr.bf16.mxu0 0
  %1579 = vmatpush1.bf16.msra.mxu0 %v1368
  %1580 = vmatprep.subr.bf16.mxu0 0
  %1581 = vmatpush1.bf16.msra.mxu0 %v1369
  %1582 = vmatprep.subr.bf16.mxu0 0
  %1583 = vmatpush1.bf16.msra.mxu0 %v1370
  %1584 = vmatprep.subr.bf16.mxu0 0
  %1585 = vmatpush1.bf16.msra.mxu0 %v1371
  %1586 = vmatprep.subr.bf16.mxu0 0
  %1587 = vmatpush1.bf16.msra.mxu0 %v1372
  %1588 = vmatprep.subr.bf16.mxu0 0
  %1589 = vmatpush1.bf16.msra.mxu0 %v1373
  %1590 = vmatprep.subr.bf16.mxu0 0
  %1591 = vmatpush1.bf16.msra.mxu0 %v1374
  %1592 = vmatprep.subr.bf16.mxu0 0
  %1593 = vmatpush1.bf16.msra.mxu0 %v1375
  %1594 = vmatprep.subr.bf16.mxu0 0
  %1595 = vmatpush1.bf16.msra.mxu0 %v1376
  %1596 = vmatprep.mubr.bf16.mxu0 %v1048
  %1597 = vmatmul.mubr.bf16.gmra.mrb[0].mxu0 %v1047
  %v1598 = vpop.f32.mrb[0].mxu0
  %v1599 = vadd.f32 %v1558, %v1598
  %v1600 = vpop.f32.mrb[0].mxu0
  %v1601 = vpop.f32.mrb[0].mxu0
  %v1602 = vadd.f32 %v1561, %v1601
  %v1603 = vpop.f32.mrb[0].mxu0
  %1604 = vdwg.mxu0
  %v1605 = vmax.f32 %v1599, 0.0
  %v1606 = vmax.f32 %v1602, 0.0
  %v1607 = vpack.c.bf16 %v1606, %v1605
  %v1608 = vld [vmem:[%s4] sm:$0xf]
  %v1609 = vld [vmem:[%s4 + $0x4] sm:$0xf]
  %v1610 = vld [vmem:[%s4 + $0x8] sm:$0xf]
  %v1611 = vld [vmem:[%s4 + $0xc] sm:$0xf]
  %v1612 = vld [vmem:[%s4 + $0x10] sm:$0xf]
  %v1613 = vld [vmem:[%s4 + $0x14] sm:$0xf]
  %v1614 = vld [vmem:[%s4 + $0x18] sm:$0xf]
  %v1615 = vld [vmem:[%s4 + $0x1c] sm:$0xf]
  %v1616 = vld [vmem:[%s4 + $0x20] sm:$0xf]
  %v1617 = vld [vmem:[%s4 + $0x24] sm:$0xf]
  %v1618 = vld [vmem:[%s4 + $0x28] sm:$0xf]
  %v1619 = vld [vmem:[%s4 + $0x2c] sm:$0xf]
  %v1620 = vld [vmem:[%s4 + $0x30] sm:$0xf]
  %v1621 = vld [vmem:[%s4 + $0x34] sm:$0xf]
  %v1622 = vld [vmem:[%s4 + $0x38] sm:$0xf]
  %v1623 = vld [vmem:[%s4 + $0x3c] sm:$0xf]
  %v1624 = vld [vmem:[%s5] sm:$0x1]
  %v1626 = vlaneseq
  %v1627 = vshrl.u32 %v1626, 7
  %v1628 = vsub.s32 0, %v1627
  %v1629 = vrot.slane %v1624, %v1628
  %v1647 = vunpack.c.l.b16 %v1608
  %v1648 = vunpack.c.l.b16 %v1609
  %v1649 = vunpack.c.l.b16 %v1610
  %v1650 = vunpack.c.l.b16 %v1611
  %v1651 = vunpack.c.l.b16 %v1612
  %v1652 = vunpack.c.l.b16 %v1613
  %v1653 = vunpack.c.l.b16 %v1614
  %v1654 = vunpack.c.l.b16 %v1615
  %v1655 = vunpack.c.l.b16 %v1616
  %v1656 = vunpack.c.l.b16 %v1617
  %v1657 = vunpack.c.l.b16 %v1618
  %v1658 = vunpack.c.l.b16 %v1619
  %v1659 = vunpack.c.l.b16 %v1620
  %v1660 = vunpack.c.l.b16 %v1621
  %v1661 = vunpack.c.l.b16 %v1622
  %v1662 = vunpack.c.l.b16 %v1623
  %v1663 = vpack.c.b16 %v1648, %v1647
  %v1664 = vpack.c.b16 %v1650, %v1649
  %v1665 = vpack.c.b16 %v1652, %v1651
  %v1666 = vpack.c.b16 %v1654, %v1653
  %v1667 = vpack.c.b16 %v1656, %v1655
  %v1668 = vpack.c.b16 %v1658, %v1657
  %v1669 = vpack.c.b16 %v1660, %v1659
  %v1670 = vpack.c.b16 %v1662, %v1661
  %1679 = vmatprep.subr.bf16.mxu0 0
  %1680 = vmatpush1.bf16.msra.mxu0 %v1663
  %1681 = vmatprep.subr.bf16.mxu0 0
  %1682 = vmatpush1.bf16.msra.mxu0 %v1664
  %1683 = vmatprep.subr.bf16.mxu0 0
  %1684 = vmatpush1.bf16.msra.mxu0 %v1665
  %1685 = vmatprep.subr.bf16.mxu0 0
  %1686 = vmatpush1.bf16.msra.mxu0 %v1666
  %1687 = vmatprep.subr.bf16.mxu0 0
  %1688 = vmatpush1.bf16.msra.mxu0 %v1667
  %1689 = vmatprep.subr.bf16.mxu0 0
  %1690 = vmatpush1.bf16.msra.mxu0 %v1668
  %1691 = vmatprep.subr.bf16.mxu0 0
  %1692 = vmatpush1.bf16.msra.mxu0 %v1669
  %1693 = vmatprep.subr.bf16.mxu0 0
  %1694 = vmatpush1.bf16.msra.mxu0 %v1670
  %1695 = vmatprep.subr.bf16.mxu0 0
  %1696 = vmatpush1.bf16.msra.mxu0 0
  %1697 = vmatprep.subr.bf16.mxu0 0
  %1698 = vmatpush1.bf16.msra.mxu0 0
  %1699 = vmatprep.subr.bf16.mxu0 0
  %1700 = vmatpush1.bf16.msra.mxu0 0
  %1701 = vmatprep.subr.bf16.mxu0 0
  %1702 = vmatpush1.bf16.msra.mxu0 0
  %1703 = vmatprep.subr.bf16.mxu0 0
  %1704 = vmatpush1.bf16.msra.mxu0 0
  %1705 = vmatprep.subr.bf16.mxu0 0
  %1706 = vmatpush1.bf16.msra.mxu0 0
  %1707 = vmatprep.subr.bf16.mxu0 0
  %1708 = vmatpush1.bf16.msra.mxu0 0
  %1709 = vmatprep.subr.bf16.mxu0 0
  %1710 = vmatpush1.bf16.msra.mxu0 0
  %1711 = vmatprep.mubr.bf16.mxu0 0
  %1712 = vmatmul.mubr.bf16.gmra.mrb[0].mxu0 %v1607
  %v1713 = vpop.f32.mrb[0].mxu0
  %v1714 = vadd.f32 %v1629, %v1713
  %v1715 = vpop.f32.mrb[0].mxu0
  %v1716 = vpop.f32.mrb[0].mxu0
  %v1717 = vadd.f32 %v1629, %v1716
  %v1718 = vpop.f32.mrb[0].mxu0
  %1719 = vdwg.mxu0
  %1720 = vst [vmem:[%s7] sm:$0xff] %v1714
  %1721 = vst [vmem:[%s7 + $0x8] sm:$0xff] %v1717
  // Predicated region
  $region26: #{_siamese_forward_pair.1} parent=0 // pred_check
    _
  $region27: #{_siamese_forward_pair.1} parent=0 // pred_check_branch
    %1723 = sbr.rel (0) target = $region29
  $region28: #{_siamese_forward_pair.1} parent=0 // pred_region
    _
  $region29: #{_siamese_forward_pair.1} parent=0 // pred_fallthru
    _
  // Predicated region
  $region30: #{_siamese_forward_pair.1} parent=0 // pred_check
    _
  $region31: #{_siamese_forward_pair.1} parent=0 // pred_check_branch
    %1725 = sbr.rel (0) target = $region33
  $region32: #{_siamese_forward_pair.1} parent=0 // pred_region
    _
  $region33: #{_siamese_forward_pair.1} parent=0 // pred_fallthru
    _
  // Predicated region
  $region34: #{_siamese_forward_pair.1} parent=0 // pred_check
    _
  $region35: #{_siamese_forward_pair.1} parent=0 // pred_check_branch
    %1727 = sbr.rel (0) target = $region37
  $region36: #{_siamese_forward_pair.1} parent=0 // pred_region
    _
  $region37: #{_siamese_forward_pair.1} parent=0 // pred_fallthru
    _
  // Predicated region
  $region38: #{_siamese_forward_pair.1} parent=0 // pred_check
    _
  $region39: #{_siamese_forward_pair.1} parent=0 // pred_check_branch
    %1729 = sbr.rel (0) target = $region41
  $region40: #{_siamese_forward_pair.1} parent=0 // pred_region
    _
  $region41: #{_siamese_forward_pair.1} parent=0 // pred_fallthru
    _

</llo_original>
